<compile_context>
chip_gen: v7x
topology: tpu7x:2x2x1
jax: 0.10.0
libtpu: 0.0.40
codegen_flags: <defaults>
</compile_context>

<pallas_src>
import jax
import jax.numpy as jnp
from jax.experimental import pallas as pl
from jax.experimental.pallas import tpu as pltpu


def se_block_kernel(x_se_ref, w1_ref, b1_ref, x_ref, w2_ref, o_ref):
    # x_se_ref: [1, Cse]      squeeze input (x155 flattened, row vector)
    # w1_ref:   [Cmid, Cse]   conv2d47 weight (1x1 conv == matmul), native layout
    # b1_ref:   [Cmid, 1]     conv2d47 bias (column)
    # x_ref:    [Cmid, HW]    main feature map (x152, channel-major / native NCHW order)
    # w2_ref:   [Cout, Cmid]  conv2d48 weight, native layout
    # o_ref:    [Cout, HW]

    # conv2d47 (1x1, single spatial position): gate = sigmoid(w1 @ x_se + b1).
    # Broadcast-multiply + lane reduction (VPU + XLU) avoids a degenerate N=1 MXU
    # matmul; sigmoid goes to the EUP.
    gate = jnp.sum(w1_ref[...] * x_se_ref[...], axis=-1, keepdims=True) + b1_ref[...]
    gate = jax.nn.sigmoid(gate)                      # [Cmid, 1], f32

    # Broadcast-multiply across spatial positions (lane broadcast of the gate column).
    scaled = x_ref[...] * gate                       # [Cmid, HW]

    # conv2d48 (1x1, no bias) on the MXU: [Cout, Cmid] @ [Cmid, HW] -> [Cout, HW].
    o_ref[...] = jnp.dot(
        w2_ref[...], scaled, preferred_element_type=jnp.float32
    ).astype(o_ref.dtype)


@jax.jit
def se_block_forward(x155, x152, w1, b1, w2):
    """x155: [1, Cse, 1, 1], x152: [1, Cmid, H, W]
       w1: [Cmid, Cse, 1, 1], b1: [Cmid], w2: [Cout, Cmid, 1, 1]
       returns: [1, Cout, H, W] (matches PyTorch NCHW output)."""
    N, Cmid, H, W = x152.shape
    assert N == 1
    Cse = x155.shape[1]
    Cout = w2.shape[0]
    HW = H * W

    # All of these are contiguity-preserving reshapes: no transposes, no data movement.
    x_c_hw = x152.reshape(Cmid, HW)       # [Cmid, HW]  (native NCHW order)
    x_se = x155.reshape(1, Cse)           # [1, Cse]
    w1_m = w1.reshape(Cmid, Cse)          # [Cmid, Cse]
    b1_col = b1.reshape(Cmid, 1)          # [Cmid, 1]
    w2_m = w2.reshape(Cout, Cmid)         # [Cout, Cmid]

    cost = pl.CostEstimate(
        flops=2 * Cout * Cmid * HW + 2 * Cmid * Cse + 2 * Cmid * HW,
        transcendentals=Cmid,
        bytes_accessed=4 * (Cmid * HW + Cout * Cmid + Cmid * Cse
                            + Cmid + Cse + Cout * HW),
    )

    out_c_hw = pl.pallas_call(
        se_block_kernel,
        out_shape=jax.ShapeDtypeStruct((Cout, HW), jnp.float32),
        in_specs=[
            pl.BlockSpec(memory_space=pltpu.MemorySpace.VMEM),
            pl.BlockSpec(memory_space=pltpu.MemorySpace.VMEM),
            pl.BlockSpec(memory_space=pltpu.MemorySpace.VMEM),
            pl.BlockSpec(memory_space=pltpu.MemorySpace.VMEM),
            pl.BlockSpec(memory_space=pltpu.MemorySpace.VMEM),
        ],
        out_specs=pl.BlockSpec(memory_space=pltpu.MemorySpace.VMEM),
        cost_estimate=cost,
    )(x_se, w1_m, b1_col, x_c_hw, w2_m)

    # [Cout, HW] -> NCHW [1, Cout, H, W]: free reshape, no transpose.
    return out_c_hw.reshape(1, Cout, H, W)


def reference_forward(x155, x152, w1, b1, w2):
    """Pure-JAX reference (same math, no Pallas)."""
    Cmid = x152.shape[1]
    Cse = x155.shape[1]
    Cout = w2.shape[0]
    # Gate computed the same way as the kernel (f32 multiply + reduce) so the check
    # is not sensitive to MXU default-precision truncation of a tiny dot.
    gate = jax.nn.sigmoid(
        jnp.sum(w1.reshape(Cmid, Cse) * x155.reshape(1, Cse), axis=-1, keepdims=True)
        + b1.reshape(Cmid, 1)
    )  # [Cmid, 1]
    scaled = x152 * gate.reshape(1, Cmid, 1, 1)
    return jnp.einsum("oc,nchw->nohw", w2.reshape(Cout, Cmid), scaled)


if __name__ == "__main__":
    key = jax.random.PRNGKey(0)
    k1, k2, k3, k4, k5 = jax.random.split(key, 5)

    Cse, Cmid, Cout, H, W = 40, 640, 160, 14, 14

    # Inputs (match the module's forward signature shapes).
    x155 = jax.random.normal(k1, (1, Cse, 1, 1), dtype=jnp.float32)
    x152 = jax.random.normal(k2, (1, Cmid, H, W), dtype=jnp.float32)

    # Deterministic parameter init (synthetic; shapes from the module's __init__).
    w1 = jax.random.normal(k3, (Cmid, Cse, 1, 1), dtype=jnp.float32) * 0.05
    b1 = jax.random.normal(k4, (Cmid,), dtype=jnp.float32) * 0.05
    w2 = jax.random.normal(k5, (Cout, Cmid, 1, 1), dtype=jnp.float32) * 0.05

    out = se_block_forward(x155, x152, w1, b1, w2)
    out = jax.block_until_ready(out)

    ref = reference_forward(x155, x152, w1, b1, w2)
    assert out.shape == (1, Cout, H, W), out.shape
    assert jnp.allclose(out, ref, atol=1e-4, rtol=1e-4), "mismatch vs reference"

    print("KERNEL_OK")
</pallas_src>

<mosaic_0001>
module attributes {stable_mosaic.version = 11 : i64} {
  func.func @se_block_kernel(%arg0: memref<1x40xf32, #tpu.memory_space<vmem>>, %arg1: memref<640x40xf32, #tpu.memory_space<vmem>>, %arg2: memref<640x1xf32, #tpu.memory_space<vmem>>, %arg3: memref<640x196xf32, #tpu.memory_space<vmem>>, %arg4: memref<160x640xf32, #tpu.memory_space<vmem>>, %arg5: memref<160x196xf32, #tpu.memory_space<vmem>>) attributes {dimension_semantics = [], scalar_prefetch = 0 : i64, scratch_operands = 0 : i64, tpu.core_type = #tpu.core_type<tc>} {
    %c0 = arith.constant 0 : index
    %c0_0 = arith.constant 0 : index
    %0 = vector.load %arg1[%c0, %c0_0] : memref<640x40xf32, #tpu.memory_space<vmem>>, vector<640x40xf32>
    %c0_1 = arith.constant 0 : index
    %c0_2 = arith.constant 0 : index
    %1 = vector.load %arg0[%c0_1, %c0_2] : memref<1x40xf32, #tpu.memory_space<vmem>>, vector<1x40xf32>
    %2 = vector.broadcast %1 : vector<1x40xf32> to vector<640x40xf32>
    %3 = arith.mulf %0, %2 : vector<640x40xf32>
    %cst = arith.constant dense<0.000000e+00> : vector<640xf32>
    %4 = vector.multi_reduction <add>, %3, %cst [1] : vector<640x40xf32> to vector<640xf32>
    %5 = vector.shape_cast %4 : vector<640xf32> to vector<640x1xf32>
    %c0_3 = arith.constant 0 : index
    %c0_4 = arith.constant 0 : index
    %6 = vector.load %arg2[%c0_3, %c0_4] : memref<640x1xf32, #tpu.memory_space<vmem>>, vector<640x1xf32>
    %7 = arith.addf %5, %6 : vector<640x1xf32>
    %8 = arith.negf %7 : vector<640x1xf32>
    %9 = math.exp %8 : vector<640x1xf32>
    %cst_5 = arith.constant 1.000000e+00 : f32
    %10 = vector.broadcast %cst_5 : f32 to vector<640x1xf32>
    %11 = arith.addf %10, %9 : vector<640x1xf32>
    %12 = arith.divf %10, %11 : vector<640x1xf32>
    %c0_6 = arith.constant 0 : index
    %c0_7 = arith.constant 0 : index
    %13 = vector.load %arg3[%c0_6, %c0_7] : memref<640x196xf32, #tpu.memory_space<vmem>>, vector<640x196xf32>
    %14 = vector.broadcast %12 : vector<640x1xf32> to vector<640x196xf32>
    %15 = arith.mulf %13, %14 : vector<640x196xf32>
    %c0_8 = arith.constant 0 : index
    %c0_9 = arith.constant 0 : index
    %16 = vector.load %arg4[%c0_8, %c0_9] : memref<160x640xf32, #tpu.memory_space<vmem>>, vector<160x640xf32>
    %cst_10 = arith.constant dense<0.000000e+00> : vector<160x196xf32>
    %17 = tpu.matmul %16, %15, %cst_10 {dimension_numbers = #tpu.dot_dimension_numbers<[1], [0], [0], [1], [0, 0, 1, 1], [], []>} : vector<160x640xf32>, vector<640x196xf32>, vector<160x196xf32> -> vector<160x196xf32>
    %c0_11 = arith.constant 0 : index
    %c0_12 = arith.constant 0 : index
    %18 = vector.load %arg5[%c0_11, %c0_12] : memref<160x196xf32, #tpu.memory_space<vmem>>, vector<160x196xf32>
    tpu.vector_store %arg5[%c0_11, %c0_12], %17 {strides = array<i32>} : memref<160x196xf32, #tpu.memory_space<vmem>>, vector<160x196xf32>,
    return
  }
}

</mosaic_0001>

<llo_original>
// kernel: se_block_forward.1
$region0: #{se_block_forward.1}
  #allocation0 [shape = 'u32[]', space=smem, size = 0x4, offset = 0x4, fixed_abs, tag = 'smem constant byte address 0x4 - core index']
  #allocation1 [shape = 'u32[144,128]{1,0:T(1,128)}', space=vmem, size = 0x12000, scoped, tag = 'internal scratch']
  %s0 = inlined_call_operand.vmem [shape: f32[1,40], index: 0, kind: input, shape index: {}]
  %s1 = inlined_call_operand.vmem [shape: f32[640,40], index: 1, kind: input, shape index: {}]
  %s2 = inlined_call_operand.vmem [shape: f32[640,1], index: 2, kind: input, shape index: {}]
  %s3 = inlined_call_operand.vmem [shape: f32[640,196], index: 3, kind: input, shape index: {}]
  %s4 = inlined_call_operand.vmem [shape: f32[160,640], index: 4, kind: input, shape index: {}]
  %s5 = inlined_call_operand.vmem [shape: f32[160,196], index: 5, kind: output, shape index: {}]
  %s6 = sld [smem:[#allocation0]]
  $region30: #{se_block_forward.1} parent=0
    _
  %s8 = ssub.s32 1, %s6
  %s9 = scalar_select 0, %s8, %s6
  // Predicated region
  $region2: #{se_block_forward.1} parent=0 // pred_check
    _
  $region3: #{se_block_forward.1} parent=0 // pred_check_branch
    %11 = sbr.rel (0) target = $region5
  $region4: #{se_block_forward.1} parent=0 // pred_region
    _
  $region5: #{se_block_forward.1} parent=0 // pred_fallthru
    _
  // Predicated region
  $region6: #{se_block_forward.1} parent=0 // pred_check
    _
  $region7: #{se_block_forward.1} parent=0 // pred_check_branch
    %13 = sbr.rel (0) target = $region9
  $region8: #{se_block_forward.1} parent=0 // pred_region
    _
  $region9: #{se_block_forward.1} parent=0 // pred_fallthru
    _
  // Predicated region
  $region10: #{se_block_forward.1} parent=0 // pred_check
    _
  $region11: #{se_block_forward.1} parent=0 // pred_check_branch
    %15 = sbr.rel (0) target = $region13
  $region12: #{se_block_forward.1} parent=0 // pred_region
    _
  $region13: #{se_block_forward.1} parent=0 // pred_fallthru
    _
  // Predicated region
  $region14: #{se_block_forward.1} parent=0 // pred_check
    _
  $region15: #{se_block_forward.1} parent=0 // pred_check_branch
    %17 = sbr.rel (0) target = $region17
  $region16: #{se_block_forward.1} parent=0 // pred_region
    _
  $region17: #{se_block_forward.1} parent=0 // pred_fallthru
    _
  // Predicated region
  $region18: #{se_block_forward.1} parent=0 // pred_check
    _
  $region19: #{se_block_forward.1} parent=0 // pred_check_branch
    %19 = sbr.rel (0) target = $region21
  $region20: #{se_block_forward.1} parent=0 // pred_region
    _
  $region21: #{se_block_forward.1} parent=0 // pred_fallthru
    _
  %v20 = vld [vmem:[%s1] sm:$0xff]
  %v21 = vld [vmem:[%s1 + $0x8] sm:$0xff]
  %v22 = vld [vmem:[%s1 + $0x10] sm:$0xff]
  %v23 = vld [vmem:[%s1 + $0x18] sm:$0xff]
  %v24 = vld [vmem:[%s1 + $0x20] sm:$0xff]
  %v25 = vld [vmem:[%s1 + $0x28] sm:$0xff]
  %v26 = vld [vmem:[%s1 + $0x30] sm:$0xff]
  %v27 = vld [vmem:[%s1 + $0x38] sm:$0xff]
  %v28 = vld [vmem:[%s1 + $0x40] sm:$0xff]
  %v29 = vld [vmem:[%s1 + $0x48] sm:$0xff]
  %v30 = vld [vmem:[%s1 + $0x50] sm:$0xff]
  %v31 = vld [vmem:[%s1 + $0x58] sm:$0xff]
  %v32 = vld [vmem:[%s1 + $0x60] sm:$0xff]
  %v33 = vld [vmem:[%s1 + $0x68] sm:$0xff]
  %v34 = vld [vmem:[%s1 + $0x70] sm:$0xff]
  %v35 = vld [vmem:[%s1 + $0x78] sm:$0xff]
  %v36 = vld [vmem:[%s1 + $0x80] sm:$0xff]
  %v37 = vld [vmem:[%s1 + $0x88] sm:$0xff]
  %v38 = vld [vmem:[%s1 + $0x90] sm:$0xff]
  %v39 = vld [vmem:[%s1 + $0x98] sm:$0xff]
  %v40 = vld [vmem:[%s1 + $0xa0] sm:$0xff]
  %v41 = vld [vmem:[%s1 + $0xa8] sm:$0xff]
  %v42 = vld [vmem:[%s1 + $0xb0] sm:$0xff]
  %v43 = vld [vmem:[%s1 + $0xb8] sm:$0xff]
  %v44 = vld [vmem:[%s1 + $0xc0] sm:$0xff]
  %v45 = vld [vmem:[%s1 + $0xc8] sm:$0xff]
  %v46 = vld [vmem:[%s1 + $0xd0] sm:$0xff]
  %v47 = vld [vmem:[%s1 + $0xd8] sm:$0xff]
  %v48 = vld [vmem:[%s1 + $0xe0] sm:$0xff]
  %v49 = vld [vmem:[%s1 + $0xe8] sm:$0xff]
  %v50 = vld [vmem:[%s1 + $0xf0] sm:$0xff]
  %v51 = vld [vmem:[%s1 + $0xf8] sm:$0xff]
  %v52 = vld [vmem:[%s1 + $0x100] sm:$0xff]
  %v53 = vld [vmem:[%s1 + $0x108] sm:$0xff]
  %v54 = vld [vmem:[%s1 + $0x110] sm:$0xff]
  %v55 = vld [vmem:[%s1 + $0x118] sm:$0xff]
  %v56 = vld [vmem:[%s1 + $0x120] sm:$0xff]
  %v57 = vld [vmem:[%s1 + $0x128] sm:$0xff]
  %v58 = vld [vmem:[%s1 + $0x130] sm:$0xff]
  %v59 = vld [vmem:[%s1 + $0x138] sm:$0xff]
  %v60 = vld [vmem:[%s1 + $0x140] sm:$0xff]
  %v61 = vld [vmem:[%s1 + $0x148] sm:$0xff]
  %v62 = vld [vmem:[%s1 + $0x150] sm:$0xff]
  %v63 = vld [vmem:[%s1 + $0x158] sm:$0xff]
  %v64 = vld [vmem:[%s1 + $0x160] sm:$0xff]
  %v65 = vld [vmem:[%s1 + $0x168] sm:$0xff]
  %v66 = vld [vmem:[%s1 + $0x170] sm:$0xff]
  %v67 = vld [vmem:[%s1 + $0x178] sm:$0xff]
  %v68 = vld [vmem:[%s1 + $0x180] sm:$0xff]
  %v69 = vld [vmem:[%s1 + $0x188] sm:$0xff]
  %v70 = vld [vmem:[%s1 + $0x190] sm:$0xff]
  %v71 = vld [vmem:[%s1 + $0x198] sm:$0xff]
  %v72 = vld [vmem:[%s1 + $0x1a0] sm:$0xff]
  %v73 = vld [vmem:[%s1 + $0x1a8] sm:$0xff]
  %v74 = vld [vmem:[%s1 + $0x1b0] sm:$0xff]
  %v75 = vld [vmem:[%s1 + $0x1b8] sm:$0xff]
  %v76 = vld [vmem:[%s1 + $0x1c0] sm:$0xff]
  %v77 = vld [vmem:[%s1 + $0x1c8] sm:$0xff]
  %v78 = vld [vmem:[%s1 + $0x1d0] sm:$0xff]
  %v79 = vld [vmem:[%s1 + $0x1d8] sm:$0xff]
  %v80 = vld [vmem:[%s1 + $0x1e0] sm:$0xff]
  %v81 = vld [vmem:[%s1 + $0x1e8] sm:$0xff]
  %v82 = vld [vmem:[%s1 + $0x1f0] sm:$0xff]
  %v83 = vld [vmem:[%s1 + $0x1f8] sm:$0xff]
  %v84 = vld [vmem:[%s1 + $0x200] sm:$0xff]
  %v85 = vld [vmem:[%s1 + $0x208] sm:$0xff]
  %v86 = vld [vmem:[%s1 + $0x210] sm:$0xff]
  %v87 = vld [vmem:[%s1 + $0x218] sm:$0xff]
  %v88 = vld [vmem:[%s1 + $0x220] sm:$0xff]
  %v89 = vld [vmem:[%s1 + $0x228] sm:$0xff]
  %v90 = vld [vmem:[%s1 + $0x230] sm:$0xff]
  %v91 = vld [vmem:[%s1 + $0x238] sm:$0xff]
  %v92 = vld [vmem:[%s1 + $0x240] sm:$0xff]
  %v93 = vld [vmem:[%s1 + $0x248] sm:$0xff]
  %v94 = vld [vmem:[%s1 + $0x250] sm:$0xff]
  %v95 = vld [vmem:[%s1 + $0x258] sm:$0xff]
  %v96 = vld [vmem:[%s1 + $0x260] sm:$0xff]
  %v97 = vld [vmem:[%s1 + $0x268] sm:$0xff]
  %v98 = vld [vmem:[%s1 + $0x270] sm:$0xff]
  %v99 = vld [vmem:[%s1 + $0x278] sm:$0xff]
  %v100 = vld [vmem:[%s0] sm:$0x1]
  %v102 = vlaneseq
  %v103 = vshrl.u32 %v102, 7
  %v104 = vsub.s32 0, %v103
  %v105 = vrot.slane %v100, %v104
  %v107 = vmul.f32 %v20, %v105
  %v108 = vmul.f32 %v21, %v105
  %v109 = vmul.f32 %v22, %v105
  %v110 = vmul.f32 %v23, %v105
  %v111 = vmul.f32 %v24, %v105
  %v112 = vmul.f32 %v25, %v105
  %v113 = vmul.f32 %v26, %v105
  %v114 = vmul.f32 %v27, %v105
  %v115 = vmul.f32 %v28, %v105
  %v116 = vmul.f32 %v29, %v105
  %v117 = vmul.f32 %v30, %v105
  %v118 = vmul.f32 %v31, %v105
  %v119 = vmul.f32 %v32, %v105
  %v120 = vmul.f32 %v33, %v105
  %v121 = vmul.f32 %v34, %v105
  %v122 = vmul.f32 %v35, %v105
  %v123 = vmul.f32 %v36, %v105
  %v124 = vmul.f32 %v37, %v105
  %v125 = vmul.f32 %v38, %v105
  %v126 = vmul.f32 %v39, %v105
  %v127 = vmul.f32 %v40, %v105
  %v128 = vmul.f32 %v41, %v105
  %v129 = vmul.f32 %v42, %v105
  %v130 = vmul.f32 %v43, %v105
  %v131 = vmul.f32 %v44, %v105
  %v132 = vmul.f32 %v45, %v105
  %v133 = vmul.f32 %v46, %v105
  %v134 = vmul.f32 %v47, %v105
  %v135 = vmul.f32 %v48, %v105
  %v136 = vmul.f32 %v49, %v105
  %v137 = vmul.f32 %v50, %v105
  %v138 = vmul.f32 %v51, %v105
  %v139 = vmul.f32 %v52, %v105
  %v140 = vmul.f32 %v53, %v105
  %v141 = vmul.f32 %v54, %v105
  %v142 = vmul.f32 %v55, %v105
  %v143 = vmul.f32 %v56, %v105
  %v144 = vmul.f32 %v57, %v105
  %v145 = vmul.f32 %v58, %v105
  %v146 = vmul.f32 %v59, %v105
  %v147 = vmul.f32 %v60, %v105
  %v148 = vmul.f32 %v61, %v105
  %v149 = vmul.f32 %v62, %v105
  %v150 = vmul.f32 %v63, %v105
  %v151 = vmul.f32 %v64, %v105
  %v152 = vmul.f32 %v65, %v105
  %v153 = vmul.f32 %v66, %v105
  %v154 = vmul.f32 %v67, %v105
  %v155 = vmul.f32 %v68, %v105
  %v156 = vmul.f32 %v69, %v105
  %v157 = vmul.f32 %v70, %v105
  %v158 = vmul.f32 %v71, %v105
  %v159 = vmul.f32 %v72, %v105
  %v160 = vmul.f32 %v73, %v105
  %v161 = vmul.f32 %v74, %v105
  %v162 = vmul.f32 %v75, %v105
  %v163 = vmul.f32 %v76, %v105
  %v164 = vmul.f32 %v77, %v105
  %v165 = vmul.f32 %v78, %v105
  %v166 = vmul.f32 %v79, %v105
  %v167 = vmul.f32 %v80, %v105
  %v168 = vmul.f32 %v81, %v105
  %v169 = vmul.f32 %v82, %v105
  %v170 = vmul.f32 %v83, %v105
  %v171 = vmul.f32 %v84, %v105
  %v172 = vmul.f32 %v85, %v105
  %v173 = vmul.f32 %v86, %v105
  %v174 = vmul.f32 %v87, %v105
  %v175 = vmul.f32 %v88, %v105
  %v176 = vmul.f32 %v89, %v105
  %v177 = vmul.f32 %v90, %v105
  %v178 = vmul.f32 %v91, %v105
  %v179 = vmul.f32 %v92, %v105
  %v180 = vmul.f32 %v93, %v105
  %v181 = vmul.f32 %v94, %v105
  %v182 = vmul.f32 %v95, %v105
  %v183 = vmul.f32 %v96, %v105
  %v184 = vmul.f32 %v97, %v105
  %v185 = vmul.f32 %v98, %v105
  %v186 = vmul.f32 %v99, %v105
  %vm187 = vcmask 326656
  %v188 = vsel %vm187, %v107, 0.0
  %189 = vadd.xlane.f32.xlu0 %v188
  %v190 = vpop.xlane.xlu0 %189
  %v191 = vsel %vm187, %v108, 0.0
  %192 = vadd.xlane.f32.xlu0 %v191
  %v193 = vpop.xlane.xlu0 %192
  %v194 = vsel %vm187, %v109, 0.0
  %195 = vadd.xlane.f32.xlu0 %v194
  %v196 = vpop.xlane.xlu0 %195
  %v197 = vsel %vm187, %v110, 0.0
  %198 = vadd.xlane.f32.xlu0 %v197
  %v199 = vpop.xlane.xlu0 %198
  %v200 = vsel %vm187, %v111, 0.0
  %201 = vadd.xlane.f32.xlu0 %v200
  %v202 = vpop.xlane.xlu0 %201
  %v203 = vsel %vm187, %v112, 0.0
  %204 = vadd.xlane.f32.xlu0 %v203
  %v205 = vpop.xlane.xlu0 %204
  %v206 = vsel %vm187, %v113, 0.0
  %207 = vadd.xlane.f32.xlu0 %v206
  %v208 = vpop.xlane.xlu0 %207
  %v209 = vsel %vm187, %v114, 0.0
  %210 = vadd.xlane.f32.xlu0 %v209
  %v211 = vpop.xlane.xlu0 %210
  %v212 = vsel %vm187, %v115, 0.0
  %213 = vadd.xlane.f32.xlu0 %v212
  %v214 = vpop.xlane.xlu0 %213
  %v215 = vsel %vm187, %v116, 0.0
  %216 = vadd.xlane.f32.xlu0 %v215
  %v217 = vpop.xlane.xlu0 %216
  %v218 = vsel %vm187, %v117, 0.0
  %219 = vadd.xlane.f32.xlu0 %v218
  %v220 = vpop.xlane.xlu0 %219
  %v221 = vsel %vm187, %v118, 0.0
  %222 = vadd.xlane.f32.xlu0 %v221
  %v223 = vpop.xlane.xlu0 %222
  %v224 = vsel %vm187, %v119, 0.0
  %225 = vadd.xlane.f32.xlu0 %v224
  %v226 = vpop.xlane.xlu0 %225
  %v227 = vsel %vm187, %v120, 0.0
  %228 = vadd.xlane.f32.xlu0 %v227
  %v229 = vpop.xlane.xlu0 %228
  %v230 = vsel %vm187, %v121, 0.0
  %231 = vadd.xlane.f32.xlu0 %v230
  %v232 = vpop.xlane.xlu0 %231
  %v233 = vsel %vm187, %v122, 0.0
  %234 = vadd.xlane.f32.xlu0 %v233
  %v235 = vpop.xlane.xlu0 %234
  %v236 = vsel %vm187, %v123, 0.0
  %237 = vadd.xlane.f32.xlu0 %v236
  %v238 = vpop.xlane.xlu0 %237
  %v239 = vsel %vm187, %v124, 0.0
  %240 = vadd.xlane.f32.xlu0 %v239
  %v241 = vpop.xlane.xlu0 %240
  %v242 = vsel %vm187, %v125, 0.0
  %243 = vadd.xlane.f32.xlu0 %v242
  %v244 = vpop.xlane.xlu0 %243
  %v245 = vsel %vm187, %v126, 0.0
  %246 = vadd.xlane.f32.xlu0 %v245
  %v247 = vpop.xlane.xlu0 %246
  %v248 = vsel %vm187, %v127, 0.0
  %249 = vadd.xlane.f32.xlu0 %v248
  %v250 = vpop.xlane.xlu0 %249
  %v251 = vsel %vm187, %v128, 0.0
  %252 = vadd.xlane.f32.xlu0 %v251
  %v253 = vpop.xlane.xlu0 %252
  %v254 = vsel %vm187, %v129, 0.0
  %255 = vadd.xlane.f32.xlu0 %v254
  %v256 = vpop.xlane.xlu0 %255
  %v257 = vsel %vm187, %v130, 0.0
  %258 = vadd.xlane.f32.xlu0 %v257
  %v259 = vpop.xlane.xlu0 %258
  %v260 = vsel %vm187, %v131, 0.0
  %261 = vadd.xlane.f32.xlu0 %v260
  %v262 = vpop.xlane.xlu0 %261
  %v263 = vsel %vm187, %v132, 0.0
  %264 = vadd.xlane.f32.xlu0 %v263
  %v265 = vpop.xlane.xlu0 %264
  %v266 = vsel %vm187, %v133, 0.0
  %267 = vadd.xlane.f32.xlu0 %v266
  %v268 = vpop.xlane.xlu0 %267
  %v269 = vsel %vm187, %v134, 0.0
  %270 = vadd.xlane.f32.xlu0 %v269
  %v271 = vpop.xlane.xlu0 %270
  %v272 = vsel %vm187, %v135, 0.0
  %273 = vadd.xlane.f32.xlu0 %v272
  %v274 = vpop.xlane.xlu0 %273
  %v275 = vsel %vm187, %v136, 0.0
  %276 = vadd.xlane.f32.xlu0 %v275
  %v277 = vpop.xlane.xlu0 %276
  %v278 = vsel %vm187, %v137, 0.0
  %279 = vadd.xlane.f32.xlu0 %v278
  %v280 = vpop.xlane.xlu0 %279
  %v281 = vsel %vm187, %v138, 0.0
  %282 = vadd.xlane.f32.xlu0 %v281
  %v283 = vpop.xlane.xlu0 %282
  %v284 = vsel %vm187, %v139, 0.0
  %285 = vadd.xlane.f32.xlu0 %v284
  %v286 = vpop.xlane.xlu0 %285
  %v287 = vsel %vm187, %v140, 0.0
  %288 = vadd.xlane.f32.xlu0 %v287
  %v289 = vpop.xlane.xlu0 %288
  %v290 = vsel %vm187, %v141, 0.0
  %291 = vadd.xlane.f32.xlu0 %v290
  %v292 = vpop.xlane.xlu0 %291
  %v293 = vsel %vm187, %v142, 0.0
  %294 = vadd.xlane.f32.xlu0 %v293
  %v295 = vpop.xlane.xlu0 %294
  %v296 = vsel %vm187, %v143, 0.0
  %297 = vadd.xlane.f32.xlu0 %v296
  %v298 = vpop.xlane.xlu0 %297
  %v299 = vsel %vm187, %v144, 0.0
  %300 = vadd.xlane.f32.xlu0 %v299
  %v301 = vpop.xlane.xlu0 %300
  %v302 = vsel %vm187, %v145, 0.0
  %303 = vadd.xlane.f32.xlu0 %v302
  %v304 = vpop.xlane.xlu0 %303
  %v305 = vsel %vm187, %v146, 0.0
  %306 = vadd.xlane.f32.xlu0 %v305
  %v307 = vpop.xlane.xlu0 %306
  %v308 = vsel %vm187, %v147, 0.0
  %309 = vadd.xlane.f32.xlu0 %v308
  %v310 = vpop.xlane.xlu0 %309
  %v311 = vsel %vm187, %v148, 0.0
  %312 = vadd.xlane.f32.xlu0 %v311
  %v313 = vpop.xlane.xlu0 %312
  %v314 = vsel %vm187, %v149, 0.0
  %315 = vadd.xlane.f32.xlu0 %v314
  %v316 = vpop.xlane.xlu0 %315
  %v317 = vsel %vm187, %v150, 0.0
  %318 = vadd.xlane.f32.xlu0 %v317
  %v319 = vpop.xlane.xlu0 %318
  %v320 = vsel %vm187, %v151, 0.0
  %321 = vadd.xlane.f32.xlu0 %v320
  %v322 = vpop.xlane.xlu0 %321
  %v323 = vsel %vm187, %v152, 0.0
  %324 = vadd.xlane.f32.xlu0 %v323
  %v325 = vpop.xlane.xlu0 %324
  %v326 = vsel %vm187, %v153, 0.0
  %327 = vadd.xlane.f32.xlu0 %v326
  %v328 = vpop.xlane.xlu0 %327
  %v329 = vsel %vm187, %v154, 0.0
  %330 = vadd.xlane.f32.xlu0 %v329
  %v331 = vpop.xlane.xlu0 %330
  %v332 = vsel %vm187, %v155, 0.0
  %333 = vadd.xlane.f32.xlu0 %v332
  %v334 = vpop.xlane.xlu0 %333
  %v335 = vsel %vm187, %v156, 0.0
  %336 = vadd.xlane.f32.xlu0 %v335
  %v337 = vpop.xlane.xlu0 %336
  %v338 = vsel %vm187, %v157, 0.0
  %339 = vadd.xlane.f32.xlu0 %v338
  %v340 = vpop.xlane.xlu0 %339
  %v341 = vsel %vm187, %v158, 0.0
  %342 = vadd.xlane.f32.xlu0 %v341
  %v343 = vpop.xlane.xlu0 %342
  %v344 = vsel %vm187, %v159, 0.0
  %345 = vadd.xlane.f32.xlu0 %v344
  %v346 = vpop.xlane.xlu0 %345
  %v347 = vsel %vm187, %v160, 0.0
  %348 = vadd.xlane.f32.xlu0 %v347
  %v349 = vpop.xlane.xlu0 %348
  %v350 = vsel %vm187, %v161, 0.0
  %351 = vadd.xlane.f32.xlu0 %v350
  %v352 = vpop.xlane.xlu0 %351
  %v353 = vsel %vm187, %v162, 0.0
  %354 = vadd.xlane.f32.xlu0 %v353
  %v355 = vpop.xlane.xlu0 %354
  %v356 = vsel %vm187, %v163, 0.0
  %357 = vadd.xlane.f32.xlu0 %v356
  %v358 = vpop.xlane.xlu0 %357
  %v359 = vsel %vm187, %v164, 0.0
  %360 = vadd.xlane.f32.xlu0 %v359
  %v361 = vpop.xlane.xlu0 %360
  %v362 = vsel %vm187, %v165, 0.0
  %363 = vadd.xlane.f32.xlu0 %v362
  %v364 = vpop.xlane.xlu0 %363
  %v365 = vsel %vm187, %v166, 0.0
  %366 = vadd.xlane.f32.xlu0 %v365
  %v367 = vpop.xlane.xlu0 %366
  %v368 = vsel %vm187, %v167, 0.0
  %369 = vadd.xlane.f32.xlu0 %v368
  %v370 = vpop.xlane.xlu0 %369
  %v371 = vsel %vm187, %v168, 0.0
  %372 = vadd.xlane.f32.xlu0 %v371
  %v373 = vpop.xlane.xlu0 %372
  %v374 = vsel %vm187, %v169, 0.0
  %375 = vadd.xlane.f32.xlu0 %v374
  %v376 = vpop.xlane.xlu0 %375
  %v377 = vsel %vm187, %v170, 0.0
  %378 = vadd.xlane.f32.xlu0 %v377
  %v379 = vpop.xlane.xlu0 %378
  %v380 = vsel %vm187, %v171, 0.0
  %381 = vadd.xlane.f32.xlu0 %v380
  %v382 = vpop.xlane.xlu0 %381
  %v383 = vsel %vm187, %v172, 0.0
  %384 = vadd.xlane.f32.xlu0 %v383
  %v385 = vpop.xlane.xlu0 %384
  %v386 = vsel %vm187, %v173, 0.0
  %387 = vadd.xlane.f32.xlu0 %v386
  %v388 = vpop.xlane.xlu0 %387
  %v389 = vsel %vm187, %v174, 0.0
  %390 = vadd.xlane.f32.xlu0 %v389
  %v391 = vpop.xlane.xlu0 %390
  %v392 = vsel %vm187, %v175, 0.0
  %393 = vadd.xlane.f32.xlu0 %v392
  %v394 = vpop.xlane.xlu0 %393
  %v395 = vsel %vm187, %v176, 0.0
  %396 = vadd.xlane.f32.xlu0 %v395
  %v397 = vpop.xlane.xlu0 %396
  %v398 = vsel %vm187, %v177, 0.0
  %399 = vadd.xlane.f32.xlu0 %v398
  %v400 = vpop.xlane.xlu0 %399
  %v401 = vsel %vm187, %v178, 0.0
  %402 = vadd.xlane.f32.xlu0 %v401
  %v403 = vpop.xlane.xlu0 %402
  %v404 = vsel %vm187, %v179, 0.0
  %405 = vadd.xlane.f32.xlu0 %v404
  %v406 = vpop.xlane.xlu0 %405
  %v407 = vsel %vm187, %v180, 0.0
  %408 = vadd.xlane.f32.xlu0 %v407
  %v409 = vpop.xlane.xlu0 %408
  %v410 = vsel %vm187, %v181, 0.0
  %411 = vadd.xlane.f32.xlu0 %v410
  %v412 = vpop.xlane.xlu0 %411
  %v413 = vsel %vm187, %v182, 0.0
  %414 = vadd.xlane.f32.xlu0 %v413
  %v415 = vpop.xlane.xlu0 %414
  %v416 = vsel %vm187, %v183, 0.0
  %417 = vadd.xlane.f32.xlu0 %v416
  %v418 = vpop.xlane.xlu0 %417
  %v419 = vsel %vm187, %v184, 0.0
  %420 = vadd.xlane.f32.xlu0 %v419
  %v421 = vpop.xlane.xlu0 %420
  %v422 = vsel %vm187, %v185, 0.0
  %423 = vadd.xlane.f32.xlu0 %v422
  %v424 = vpop.xlane.xlu0 %423
  %v425 = vsel %vm187, %v186, 0.0
  %426 = vadd.xlane.f32.xlu0 %v425
  %v427 = vpop.xlane.xlu0 %426
  %v428 = vld [vmem:[%s2] sm:$0xff]
  %v429 = vld [vmem:[%s2 + $0x8] sm:$0xff]
  %v430 = vld [vmem:[%s2 + $0x10] sm:$0xff]
  %v431 = vld [vmem:[%s2 + $0x18] sm:$0xff]
  %v432 = vld [vmem:[%s2 + $0x20] sm:$0xff]
  %v433 = vld [vmem:[%s2 + $0x28] sm:$0xff]
  %v434 = vld [vmem:[%s2 + $0x30] sm:$0xff]
  %v435 = vld [vmem:[%s2 + $0x38] sm:$0xff]
  %v436 = vld [vmem:[%s2 + $0x40] sm:$0xff]
  %v437 = vld [vmem:[%s2 + $0x48] sm:$0xff]
  %v438 = vld [vmem:[%s2 + $0x50] sm:$0xff]
  %v439 = vld [vmem:[%s2 + $0x58] sm:$0xff]
  %v440 = vld [vmem:[%s2 + $0x60] sm:$0xff]
  %v441 = vld [vmem:[%s2 + $0x68] sm:$0xff]
  %v442 = vld [vmem:[%s2 + $0x70] sm:$0xff]
  %v443 = vld [vmem:[%s2 + $0x78] sm:$0xff]
  %v444 = vld [vmem:[%s2 + $0x80] sm:$0xff]
  %v445 = vld [vmem:[%s2 + $0x88] sm:$0xff]
  %v446 = vld [vmem:[%s2 + $0x90] sm:$0xff]
  %v447 = vld [vmem:[%s2 + $0x98] sm:$0xff]
  %v448 = vld [vmem:[%s2 + $0xa0] sm:$0xff]
  %v449 = vld [vmem:[%s2 + $0xa8] sm:$0xff]
  %v450 = vld [vmem:[%s2 + $0xb0] sm:$0xff]
  %v451 = vld [vmem:[%s2 + $0xb8] sm:$0xff]
  %v452 = vld [vmem:[%s2 + $0xc0] sm:$0xff]
  %v453 = vld [vmem:[%s2 + $0xc8] sm:$0xff]
  %v454 = vld [vmem:[%s2 + $0xd0] sm:$0xff]
  %v455 = vld [vmem:[%s2 + $0xd8] sm:$0xff]
  %v456 = vld [vmem:[%s2 + $0xe0] sm:$0xff]
  %v457 = vld [vmem:[%s2 + $0xe8] sm:$0xff]
  %v458 = vld [vmem:[%s2 + $0xf0] sm:$0xff]
  %v459 = vld [vmem:[%s2 + $0xf8] sm:$0xff]
  %v460 = vld [vmem:[%s2 + $0x100] sm:$0xff]
  %v461 = vld [vmem:[%s2 + $0x108] sm:$0xff]
  %v462 = vld [vmem:[%s2 + $0x110] sm:$0xff]
  %v463 = vld [vmem:[%s2 + $0x118] sm:$0xff]
  %v464 = vld [vmem:[%s2 + $0x120] sm:$0xff]
  %v465 = vld [vmem:[%s2 + $0x128] sm:$0xff]
  %v466 = vld [vmem:[%s2 + $0x130] sm:$0xff]
  %v467 = vld [vmem:[%s2 + $0x138] sm:$0xff]
  %v468 = vld [vmem:[%s2 + $0x140] sm:$0xff]
  %v469 = vld [vmem:[%s2 + $0x148] sm:$0xff]
  %v470 = vld [vmem:[%s2 + $0x150] sm:$0xff]
  %v471 = vld [vmem:[%s2 + $0x158] sm:$0xff]
  %v472 = vld [vmem:[%s2 + $0x160] sm:$0xff]
  %v473 = vld [vmem:[%s2 + $0x168] sm:$0xff]
  %v474 = vld [vmem:[%s2 + $0x170] sm:$0xff]
  %v475 = vld [vmem:[%s2 + $0x178] sm:$0xff]
  %v476 = vld [vmem:[%s2 + $0x180] sm:$0xff]
  %v477 = vld [vmem:[%s2 + $0x188] sm:$0xff]
  %v478 = vld [vmem:[%s2 + $0x190] sm:$0xff]
  %v479 = vld [vmem:[%s2 + $0x198] sm:$0xff]
  %v480 = vld [vmem:[%s2 + $0x1a0] sm:$0xff]
  %v481 = vld [vmem:[%s2 + $0x1a8] sm:$0xff]
  %v482 = vld [vmem:[%s2 + $0x1b0] sm:$0xff]
  %v483 = vld [vmem:[%s2 + $0x1b8] sm:$0xff]
  %v484 = vld [vmem:[%s2 + $0x1c0] sm:$0xff]
  %v485 = vld [vmem:[%s2 + $0x1c8] sm:$0xff]
  %v486 = vld [vmem:[%s2 + $0x1d0] sm:$0xff]
  %v487 = vld [vmem:[%s2 + $0x1d8] sm:$0xff]
  %v488 = vld [vmem:[%s2 + $0x1e0] sm:$0xff]
  %v489 = vld [vmem:[%s2 + $0x1e8] sm:$0xff]
  %v490 = vld [vmem:[%s2 + $0x1f0] sm:$0xff]
  %v491 = vld [vmem:[%s2 + $0x1f8] sm:$0xff]
  %v492 = vld [vmem:[%s2 + $0x200] sm:$0xff]
  %v493 = vld [vmem:[%s2 + $0x208] sm:$0xff]
  %v494 = vld [vmem:[%s2 + $0x210] sm:$0xff]
  %v495 = vld [vmem:[%s2 + $0x218] sm:$0xff]
  %v496 = vld [vmem:[%s2 + $0x220] sm:$0xff]
  %v497 = vld [vmem:[%s2 + $0x228] sm:$0xff]
  %v498 = vld [vmem:[%s2 + $0x230] sm:$0xff]
  %v499 = vld [vmem:[%s2 + $0x238] sm:$0xff]
  %v500 = vld [vmem:[%s2 + $0x240] sm:$0xff]
  %v501 = vld [vmem:[%s2 + $0x248] sm:$0xff]
  %v502 = vld [vmem:[%s2 + $0x250] sm:$0xff]
  %v503 = vld [vmem:[%s2 + $0x258] sm:$0xff]
  %v504 = vld [vmem:[%s2 + $0x260] sm:$0xff]
  %v505 = vld [vmem:[%s2 + $0x268] sm:$0xff]
  %v506 = vld [vmem:[%s2 + $0x270] sm:$0xff]
  %v507 = vld [vmem:[%s2 + $0x278] sm:$0xff]
  %v508 = vadd.f32 %v190, %v428
  %v509 = vadd.f32 %v193, %v429
  %v510 = vadd.f32 %v196, %v430
  %v511 = vadd.f32 %v199, %v431
  %v512 = vadd.f32 %v202, %v432
  %v513 = vadd.f32 %v205, %v433
  %v514 = vadd.f32 %v208, %v434
  %v515 = vadd.f32 %v211, %v435
  %v516 = vadd.f32 %v214, %v436
  %v517 = vadd.f32 %v217, %v437
  %v518 = vadd.f32 %v220, %v438
  %v519 = vadd.f32 %v223, %v439
  %v520 = vadd.f32 %v226, %v440
  %v521 = vadd.f32 %v229, %v441
  %v522 = vadd.f32 %v232, %v442
  %v523 = vadd.f32 %v235, %v443
  %v524 = vadd.f32 %v238, %v444
  %v525 = vadd.f32 %v241, %v445
  %v526 = vadd.f32 %v244, %v446
  %v527 = vadd.f32 %v247, %v447
  %v528 = vadd.f32 %v250, %v448
  %v529 = vadd.f32 %v253, %v449
  %v530 = vadd.f32 %v256, %v450
  %v531 = vadd.f32 %v259, %v451
  %v532 = vadd.f32 %v262, %v452
  %v533 = vadd.f32 %v265, %v453
  %v534 = vadd.f32 %v268, %v454
  %v535 = vadd.f32 %v271, %v455
  %v536 = vadd.f32 %v274, %v456
  %v537 = vadd.f32 %v277, %v457
  %v538 = vadd.f32 %v280, %v458
  %v539 = vadd.f32 %v283, %v459
  %v540 = vadd.f32 %v286, %v460
  %v541 = vadd.f32 %v289, %v461
  %v542 = vadd.f32 %v292, %v462
  %v543 = vadd.f32 %v295, %v463
  %v544 = vadd.f32 %v298, %v464
  %v545 = vadd.f32 %v301, %v465
  %v546 = vadd.f32 %v304, %v466
  %v547 = vadd.f32 %v307, %v467
  %v548 = vadd.f32 %v310, %v468
  %v549 = vadd.f32 %v313, %v469
  %v550 = vadd.f32 %v316, %v470
  %v551 = vadd.f32 %v319, %v471
  %v552 = vadd.f32 %v322, %v472
  %v553 = vadd.f32 %v325, %v473
  %v554 = vadd.f32 %v328, %v474
  %v555 = vadd.f32 %v331, %v475
  %v556 = vadd.f32 %v334, %v476
  %v557 = vadd.f32 %v337, %v477
  %v558 = vadd.f32 %v340, %v478
  %v559 = vadd.f32 %v343, %v479
  %v560 = vadd.f32 %v346, %v480
  %v561 = vadd.f32 %v349, %v481
  %v562 = vadd.f32 %v352, %v482
  %v563 = vadd.f32 %v355, %v483
  %v564 = vadd.f32 %v358, %v484
  %v565 = vadd.f32 %v361, %v485
  %v566 = vadd.f32 %v364, %v486
  %v567 = vadd.f32 %v367, %v487
  %v568 = vadd.f32 %v370, %v488
  %v569 = vadd.f32 %v373, %v489
  %v570 = vadd.f32 %v376, %v490
  %v571 = vadd.f32 %v379, %v491
  %v572 = vadd.f32 %v382, %v492
  %v573 = vadd.f32 %v385, %v493
  %v574 = vadd.f32 %v388, %v494
  %v575 = vadd.f32 %v391, %v495
  %v576 = vadd.f32 %v394, %v496
  %v577 = vadd.f32 %v397, %v497
  %v578 = vadd.f32 %v400, %v498
  %v579 = vadd.f32 %v403, %v499
  %v580 = vadd.f32 %v406, %v500
  %v581 = vadd.f32 %v409, %v501
  %v582 = vadd.f32 %v412, %v502
  %v583 = vadd.f32 %v415, %v503
  %v584 = vadd.f32 %v418, %v504
  %v585 = vadd.f32 %v421, %v505
  %v586 = vadd.f32 %v424, %v506
  %v587 = vadd.f32 %v427, %v507
  %v588 = vxor.u32 %v508, 2147483648
  %v589 = vxor.u32 %v509, 2147483648
  %v590 = vxor.u32 %v510, 2147483648
  %v591 = vxor.u32 %v511, 2147483648
  %v592 = vxor.u32 %v512, 2147483648
  %v593 = vxor.u32 %v513, 2147483648
  %v594 = vxor.u32 %v514, 2147483648
  %v595 = vxor.u32 %v515, 2147483648
  %v596 = vxor.u32 %v516, 2147483648
  %v597 = vxor.u32 %v517, 2147483648
  %v598 = vxor.u32 %v518, 2147483648
  %v599 = vxor.u32 %v519, 2147483648
  %v600 = vxor.u32 %v520, 2147483648
  %v601 = vxor.u32 %v521, 2147483648
  %v602 = vxor.u32 %v522, 2147483648
  %v603 = vxor.u32 %v523, 2147483648
  %v604 = vxor.u32 %v524, 2147483648
  %v605 = vxor.u32 %v525, 2147483648
  %v606 = vxor.u32 %v526, 2147483648
  %v607 = vxor.u32 %v527, 2147483648
  %v608 = vxor.u32 %v528, 2147483648
  %v609 = vxor.u32 %v529, 2147483648
  %v610 = vxor.u32 %v530, 2147483648
  %v611 = vxor.u32 %v531, 2147483648
  %v612 = vxor.u32 %v532, 2147483648
  %v613 = vxor.u32 %v533, 2147483648
  %v614 = vxor.u32 %v534, 2147483648
  %v615 = vxor.u32 %v535, 2147483648
  %v616 = vxor.u32 %v536, 2147483648
  %v617 = vxor.u32 %v537, 2147483648
  %v618 = vxor.u32 %v538, 2147483648
  %v619 = vxor.u32 %v539, 2147483648
  %v620 = vxor.u32 %v540, 2147483648
  %v621 = vxor.u32 %v541, 2147483648
  %v622 = vxor.u32 %v542, 2147483648
  %v623 = vxor.u32 %v543, 2147483648
  %v624 = vxor.u32 %v544, 2147483648
  %v625 = vxor.u32 %v545, 2147483648
  %v626 = vxor.u32 %v546, 2147483648
  %v627 = vxor.u32 %v547, 2147483648
  %v628 = vxor.u32 %v548, 2147483648
  %v629 = vxor.u32 %v549, 2147483648
  %v630 = vxor.u32 %v550, 2147483648
  %v631 = vxor.u32 %v551, 2147483648
  %v632 = vxor.u32 %v552, 2147483648
  %v633 = vxor.u32 %v553, 2147483648
  %v634 = vxor.u32 %v554, 2147483648
  %v635 = vxor.u32 %v555, 2147483648
  %v636 = vxor.u32 %v556, 2147483648
  %v637 = vxor.u32 %v557, 2147483648
  %v638 = vxor.u32 %v558, 2147483648
  %v639 = vxor.u32 %v559, 2147483648
  %v640 = vxor.u32 %v560, 2147483648
  %v641 = vxor.u32 %v561, 2147483648
  %v642 = vxor.u32 %v562, 2147483648
  %v643 = vxor.u32 %v563, 2147483648
  %v644 = vxor.u32 %v564, 2147483648
  %v645 = vxor.u32 %v565, 2147483648
  %v646 = vxor.u32 %v566, 2147483648
  %v647 = vxor.u32 %v567, 2147483648
  %v648 = vxor.u32 %v568, 2147483648
  %v649 = vxor.u32 %v569, 2147483648
  %v650 = vxor.u32 %v570, 2147483648
  %v651 = vxor.u32 %v571, 2147483648
  %v652 = vxor.u32 %v572, 2147483648
  %v653 = vxor.u32 %v573, 2147483648
  %v654 = vxor.u32 %v574, 2147483648
  %v655 = vxor.u32 %v575, 2147483648
  %v656 = vxor.u32 %v576, 2147483648
  %v657 = vxor.u32 %v577, 2147483648
  %v658 = vxor.u32 %v578, 2147483648
  %v659 = vxor.u32 %v579, 2147483648
  %v660 = vxor.u32 %v580, 2147483648
  %v661 = vxor.u32 %v581, 2147483648
  %v662 = vxor.u32 %v582, 2147483648
  %v663 = vxor.u32 %v583, 2147483648
  %v664 = vxor.u32 %v584, 2147483648
  %v665 = vxor.u32 %v585, 2147483648
  %v666 = vxor.u32 %v586, 2147483648
  %v667 = vxor.u32 %v587, 2147483648
  %v668 = vmul.f32 %v588, 1.442695
  %v669 = vpow.pop %v668
  %v670 = vmul.f32 %v589, 1.442695
  %v671 = vpow.pop %v670
  %v672 = vmul.f32 %v590, 1.442695
  %v673 = vpow.pop %v672
  %v674 = vmul.f32 %v591, 1.442695
  %v675 = vpow.pop %v674
  %v676 = vmul.f32 %v592, 1.442695
  %v677 = vpow.pop %v676
  %v678 = vmul.f32 %v593, 1.442695
  %v679 = vpow.pop %v678
  %v680 = vmul.f32 %v594, 1.442695
  %v681 = vpow.pop %v680
  %v682 = vmul.f32 %v595, 1.442695
  %v683 = vpow.pop %v682
  %v684 = vmul.f32 %v596, 1.442695
  %v685 = vpow.pop %v684
  %v686 = vmul.f32 %v597, 1.442695
  %v687 = vpow.pop %v686
  %v688 = vmul.f32 %v598, 1.442695
  %v689 = vpow.pop %v688
  %v690 = vmul.f32 %v599, 1.442695
  %v691 = vpow.pop %v690
  %v692 = vmul.f32 %v600, 1.442695
  %v693 = vpow.pop %v692
  %v694 = vmul.f32 %v601, 1.442695
  %v695 = vpow.pop %v694
  %v696 = vmul.f32 %v602, 1.442695
  %v697 = vpow.pop %v696
  %v698 = vmul.f32 %v603, 1.442695
  %v699 = vpow.pop %v698
  %v700 = vmul.f32 %v604, 1.442695
  %v701 = vpow.pop %v700
  %v702 = vmul.f32 %v605, 1.442695
  %v703 = vpow.pop %v702
  %v704 = vmul.f32 %v606, 1.442695
  %v705 = vpow.pop %v704
  %v706 = vmul.f32 %v607, 1.442695
  %v707 = vpow.pop %v706
  %v708 = vmul.f32 %v608, 1.442695
  %v709 = vpow.pop %v708
  %v710 = vmul.f32 %v609, 1.442695
  %v711 = vpow.pop %v710
  %v712 = vmul.f32 %v610, 1.442695
  %v713 = vpow.pop %v712
  %v714 = vmul.f32 %v611, 1.442695
  %v715 = vpow.pop %v714
  %v716 = vmul.f32 %v612, 1.442695
  %v717 = vpow.pop %v716
  %v718 = vmul.f32 %v613, 1.442695
  %v719 = vpow.pop %v718
  %v720 = vmul.f32 %v614, 1.442695
  %v721 = vpow.pop %v720
  %v722 = vmul.f32 %v615, 1.442695
  %v723 = vpow.pop %v722
  %v724 = vmul.f32 %v616, 1.442695
  %v725 = vpow.pop %v724
  %v726 = vmul.f32 %v617, 1.442695
  %v727 = vpow.pop %v726
  %v728 = vmul.f32 %v618, 1.442695
  %v729 = vpow.pop %v728
  %v730 = vmul.f32 %v619, 1.442695
  %v731 = vpow.pop %v730
  %v732 = vmul.f32 %v620, 1.442695
  %v733 = vpow.pop %v732
  %v734 = vmul.f32 %v621, 1.442695
  %v735 = vpow.pop %v734
  %v736 = vmul.f32 %v622, 1.442695
  %v737 = vpow.pop %v736
  %v738 = vmul.f32 %v623, 1.442695
  %v739 = vpow.pop %v738
  %v740 = vmul.f32 %v624, 1.442695
  %v741 = vpow.pop %v740
  %v742 = vmul.f32 %v625, 1.442695
  %v743 = vpow.pop %v742
  %v744 = vmul.f32 %v626, 1.442695
  %v745 = vpow.pop %v744
  %v746 = vmul.f32 %v627, 1.442695
  %v747 = vpow.pop %v746
  %v748 = vmul.f32 %v628, 1.442695
  %v749 = vpow.pop %v748
  %v750 = vmul.f32 %v629, 1.442695
  %v751 = vpow.pop %v750
  %v752 = vmul.f32 %v630, 1.442695
  %v753 = vpow.pop %v752
  %v754 = vmul.f32 %v631, 1.442695
  %v755 = vpow.pop %v754
  %v756 = vmul.f32 %v632, 1.442695
  %v757 = vpow.pop %v756
  %v758 = vmul.f32 %v633, 1.442695
  %v759 = vpow.pop %v758
  %v760 = vmul.f32 %v634, 1.442695
  %v761 = vpow.pop %v760
  %v762 = vmul.f32 %v635, 1.442695
  %v763 = vpow.pop %v762
  %v764 = vmul.f32 %v636, 1.442695
  %v765 = vpow.pop %v764
  %v766 = vmul.f32 %v637, 1.442695
  %v767 = vpow.pop %v766
  %v768 = vmul.f32 %v638, 1.442695
  %v769 = vpow.pop %v768
  %v770 = vmul.f32 %v639, 1.442695
  %v771 = vpow.pop %v770
  %v772 = vmul.f32 %v640, 1.442695
  %v773 = vpow.pop %v772
  %v774 = vmul.f32 %v641, 1.442695
  %v775 = vpow.pop %v774
  %v776 = vmul.f32 %v642, 1.442695
  %v777 = vpow.pop %v776
  %v778 = vmul.f32 %v643, 1.442695
  %v779 = vpow.pop %v778
  %v780 = vmul.f32 %v644, 1.442695
  %v781 = vpow.pop %v780
  %v782 = vmul.f32 %v645, 1.442695
  %v783 = vpow.pop %v782
  %v784 = vmul.f32 %v646, 1.442695
  %v785 = vpow.pop %v784
  %v786 = vmul.f32 %v647, 1.442695
  %v787 = vpow.pop %v786
  %v788 = vmul.f32 %v648, 1.442695
  %v789 = vpow.pop %v788
  %v790 = vmul.f32 %v649, 1.442695
  %v791 = vpow.pop %v790
  %v792 = vmul.f32 %v650, 1.442695
  %v793 = vpow.pop %v792
  %v794 = vmul.f32 %v651, 1.442695
  %v795 = vpow.pop %v794
  %v796 = vmul.f32 %v652, 1.442695
  %v797 = vpow.pop %v796
  %v798 = vmul.f32 %v653, 1.442695
  %v799 = vpow.pop %v798
  %v800 = vmul.f32 %v654, 1.442695
  %v801 = vpow.pop %v800
  %v802 = vmul.f32 %v655, 1.442695
  %v803 = vpow.pop %v802
  %v804 = vmul.f32 %v656, 1.442695
  %v805 = vpow.pop %v804
  %v806 = vmul.f32 %v657, 1.442695
  %v807 = vpow.pop %v806
  %v808 = vmul.f32 %v658, 1.442695
  %v809 = vpow.pop %v808
  %v810 = vmul.f32 %v659, 1.442695
  %v811 = vpow.pop %v810
  %v812 = vmul.f32 %v660, 1.442695
  %v813 = vpow.pop %v812
  %v814 = vmul.f32 %v661, 1.442695
  %v815 = vpow.pop %v814
  %v816 = vmul.f32 %v662, 1.442695
  %v817 = vpow.pop %v816
  %v818 = vmul.f32 %v663, 1.442695
  %v819 = vpow.pop %v818
  %v820 = vmul.f32 %v664, 1.442695
  %v821 = vpow.pop %v820
  %v822 = vmul.f32 %v665, 1.442695
  %v823 = vpow.pop %v822
  %v824 = vmul.f32 %v666, 1.442695
  %v825 = vpow.pop %v824
  %v826 = vmul.f32 %v667, 1.442695
  %v827 = vpow.pop %v826
  %v828 = vadd.f32 %v669, 1.0
  %v829 = vadd.f32 %v671, 1.0
  %v830 = vadd.f32 %v673, 1.0
  %v831 = vadd.f32 %v675, 1.0
  %v832 = vadd.f32 %v677, 1.0
  %v833 = vadd.f32 %v679, 1.0
  %v834 = vadd.f32 %v681, 1.0
  %v835 = vadd.f32 %v683, 1.0
  %v836 = vadd.f32 %v685, 1.0
  %v837 = vadd.f32 %v687, 1.0
  %v838 = vadd.f32 %v689, 1.0
  %v839 = vadd.f32 %v691, 1.0
  %v840 = vadd.f32 %v693, 1.0
  %v841 = vadd.f32 %v695, 1.0
  %v842 = vadd.f32 %v697, 1.0
  %v843 = vadd.f32 %v699, 1.0
  %v844 = vadd.f32 %v701, 1.0
  %v845 = vadd.f32 %v703, 1.0
  %v846 = vadd.f32 %v705, 1.0
  %v847 = vadd.f32 %v707, 1.0
  %v848 = vadd.f32 %v709, 1.0
  %v849 = vadd.f32 %v711, 1.0
  %v850 = vadd.f32 %v713, 1.0
  %v851 = vadd.f32 %v715, 1.0
  %v852 = vadd.f32 %v717, 1.0
  %v853 = vadd.f32 %v719, 1.0
  %v854 = vadd.f32 %v721, 1.0
  %v855 = vadd.f32 %v723, 1.0
  %v856 = vadd.f32 %v725, 1.0
  %v857 = vadd.f32 %v727, 1.0
  %v858 = vadd.f32 %v729, 1.0
  %v859 = vadd.f32 %v731, 1.0
  %v860 = vadd.f32 %v733, 1.0
  %v861 = vadd.f32 %v735, 1.0
  %v862 = vadd.f32 %v737, 1.0
  %v863 = vadd.f32 %v739, 1.0
  %v864 = vadd.f32 %v741, 1.0
  %v865 = vadd.f32 %v743, 1.0
  %v866 = vadd.f32 %v745, 1.0
  %v867 = vadd.f32 %v747, 1.0
  %v868 = vadd.f32 %v749, 1.0
  %v869 = vadd.f32 %v751, 1.0
  %v870 = vadd.f32 %v753, 1.0
  %v871 = vadd.f32 %v755, 1.0
  %v872 = vadd.f32 %v757, 1.0
  %v873 = vadd.f32 %v759, 1.0
  %v874 = vadd.f32 %v761, 1.0
  %v875 = vadd.f32 %v763, 1.0
  %v876 = vadd.f32 %v765, 1.0
  %v877 = vadd.f32 %v767, 1.0
  %v878 = vadd.f32 %v769, 1.0
  %v879 = vadd.f32 %v771, 1.0
  %v880 = vadd.f32 %v773, 1.0
  %v881 = vadd.f32 %v775, 1.0
  %v882 = vadd.f32 %v777, 1.0
  %v883 = vadd.f32 %v779, 1.0
  %v884 = vadd.f32 %v781, 1.0
  %v885 = vadd.f32 %v783, 1.0
  %v886 = vadd.f32 %v785, 1.0
  %v887 = vadd.f32 %v787, 1.0
  %v888 = vadd.f32 %v789, 1.0
  %v889 = vadd.f32 %v791, 1.0
  %v890 = vadd.f32 %v793, 1.0
  %v891 = vadd.f32 %v795, 1.0
  %v892 = vadd.f32 %v797, 1.0
  %v893 = vadd.f32 %v799, 1.0
  %v894 = vadd.f32 %v801, 1.0
  %v895 = vadd.f32 %v803, 1.0
  %v896 = vadd.f32 %v805, 1.0
  %v897 = vadd.f32 %v807, 1.0
  %v898 = vadd.f32 %v809, 1.0
  %v899 = vadd.f32 %v811, 1.0
  %v900 = vadd.f32 %v813, 1.0
  %v901 = vadd.f32 %v815, 1.0
  %v902 = vadd.f32 %v817, 1.0
  %v903 = vadd.f32 %v819, 1.0
  %v904 = vadd.f32 %v821, 1.0
  %v905 = vadd.f32 %v823, 1.0
  %v906 = vadd.f32 %v825, 1.0
  %v907 = vadd.f32 %v827, 1.0
  %v908 = vrcp.pop %v828
  %v909 = vmul.f32 1.0, %v908
  %v910 = vrcp.pop %v829
  %v911 = vmul.f32 1.0, %v910
  %v912 = vrcp.pop %v830
  %v913 = vmul.f32 1.0, %v912
  %v914 = vrcp.pop %v831
  %v915 = vmul.f32 1.0, %v914
  %v916 = vrcp.pop %v832
  %v917 = vmul.f32 1.0, %v916
  %v918 = vrcp.pop %v833
  %v919 = vmul.f32 1.0, %v918
  %v920 = vrcp.pop %v834
  %v921 = vmul.f32 1.0, %v920
  %v922 = vrcp.pop %v835
  %v923 = vmul.f32 1.0, %v922
  %v924 = vrcp.pop %v836
  %v925 = vmul.f32 1.0, %v924
  %v926 = vrcp.pop %v837
  %v927 = vmul.f32 1.0, %v926
  %v928 = vrcp.pop %v838
  %v929 = vmul.f32 1.0, %v928
  %v930 = vrcp.pop %v839
  %v931 = vmul.f32 1.0, %v930
  %v932 = vrcp.pop %v840
  %v933 = vmul.f32 1.0, %v932
  %v934 = vrcp.pop %v841
  %v935 = vmul.f32 1.0, %v934
  %v936 = vrcp.pop %v842
  %v937 = vmul.f32 1.0, %v936
  %v938 = vrcp.pop %v843
  %v939 = vmul.f32 1.0, %v938
  %v940 = vrcp.pop %v844
  %v941 = vmul.f32 1.0, %v940
  %v942 = vrcp.pop %v845
  %v943 = vmul.f32 1.0, %v942
  %v944 = vrcp.pop %v846
  %v945 = vmul.f32 1.0, %v944
  %v946 = vrcp.pop %v847
  %v947 = vmul.f32 1.0, %v946
  %v948 = vrcp.pop %v848
  %v949 = vmul.f32 1.0, %v948
  %v950 = vrcp.pop %v849
  %v951 = vmul.f32 1.0, %v950
  %v952 = vrcp.pop %v850
  %v953 = vmul.f32 1.0, %v952
  %v954 = vrcp.pop %v851
  %v955 = vmul.f32 1.0, %v954
  %v956 = vrcp.pop %v852
  %v957 = vmul.f32 1.0, %v956
  %v958 = vrcp.pop %v853
  %v959 = vmul.f32 1.0, %v958
  %v960 = vrcp.pop %v854
  %v961 = vmul.f32 1.0, %v960
  %v962 = vrcp.pop %v855
  %v963 = vmul.f32 1.0, %v962
  %v964 = vrcp.pop %v856
  %v965 = vmul.f32 1.0, %v964
  %v966 = vrcp.pop %v857
  %v967 = vmul.f32 1.0, %v966
  %v968 = vrcp.pop %v858
  %v969 = vmul.f32 1.0, %v968
  %v970 = vrcp.pop %v859
  %v971 = vmul.f32 1.0, %v970
  %v972 = vrcp.pop %v860
  %v973 = vmul.f32 1.0, %v972
  %v974 = vrcp.pop %v861
  %v975 = vmul.f32 1.0, %v974
  %v976 = vrcp.pop %v862
  %v977 = vmul.f32 1.0, %v976
  %v978 = vrcp.pop %v863
  %v979 = vmul.f32 1.0, %v978
  %v980 = vrcp.pop %v864
  %v981 = vmul.f32 1.0, %v980
  %v982 = vrcp.pop %v865
  %v983 = vmul.f32 1.0, %v982
  %v984 = vrcp.pop %v866
  %v985 = vmul.f32 1.0, %v984
  %v986 = vrcp.pop %v867
  %v987 = vmul.f32 1.0, %v986
  %v988 = vrcp.pop %v868
  %v989 = vmul.f32 1.0, %v988
  %v990 = vrcp.pop %v869
  %v991 = vmul.f32 1.0, %v990
  %v992 = vrcp.pop %v870
  %v993 = vmul.f32 1.0, %v992
  %v994 = vrcp.pop %v871
  %v995 = vmul.f32 1.0, %v994
  %v996 = vrcp.pop %v872
  %v997 = vmul.f32 1.0, %v996
  %v998 = vrcp.pop %v873
  %v999 = vmul.f32 1.0, %v998
  %v1000 = vrcp.pop %v874
  %v1001 = vmul.f32 1.0, %v1000
  %v1002 = vrcp.pop %v875
  %v1003 = vmul.f32 1.0, %v1002
  %v1004 = vrcp.pop %v876
  %v1005 = vmul.f32 1.0, %v1004
  %v1006 = vrcp.pop %v877
  %v1007 = vmul.f32 1.0, %v1006
  %v1008 = vrcp.pop %v878
  %v1009 = vmul.f32 1.0, %v1008
  %v1010 = vrcp.pop %v879
  %v1011 = vmul.f32 1.0, %v1010
  %v1012 = vrcp.pop %v880
  %v1013 = vmul.f32 1.0, %v1012
  %v1014 = vrcp.pop %v881
  %v1015 = vmul.f32 1.0, %v1014
  %v1016 = vrcp.pop %v882
  %v1017 = vmul.f32 1.0, %v1016
  %v1018 = vrcp.pop %v883
  %v1019 = vmul.f32 1.0, %v1018
  %v1020 = vrcp.pop %v884
  %v1021 = vmul.f32 1.0, %v1020
  %v1022 = vrcp.pop %v885
  %v1023 = vmul.f32 1.0, %v1022
  %v1024 = vrcp.pop %v886
  %v1025 = vmul.f32 1.0, %v1024
  %v1026 = vrcp.pop %v887
  %v1027 = vmul.f32 1.0, %v1026
  %v1028 = vrcp.pop %v888
  %v1029 = vmul.f32 1.0, %v1028
  %v1030 = vrcp.pop %v889
  %v1031 = vmul.f32 1.0, %v1030
  %v1032 = vrcp.pop %v890
  %v1033 = vmul.f32 1.0, %v1032
  %v1034 = vrcp.pop %v891
  %v1035 = vmul.f32 1.0, %v1034
  %v1036 = vrcp.pop %v892
  %v1037 = vmul.f32 1.0, %v1036
  %v1038 = vrcp.pop %v893
  %v1039 = vmul.f32 1.0, %v1038
  %v1040 = vrcp.pop %v894
  %v1041 = vmul.f32 1.0, %v1040
  %v1042 = vrcp.pop %v895
  %v1043 = vmul.f32 1.0, %v1042
  %v1044 = vrcp.pop %v896
  %v1045 = vmul.f32 1.0, %v1044
  %v1046 = vrcp.pop %v897
  %v1047 = vmul.f32 1.0, %v1046
  %v1048 = vrcp.pop %v898
  %v1049 = vmul.f32 1.0, %v1048
  %v1050 = vrcp.pop %v899
  %v1051 = vmul.f32 1.0, %v1050
  %v1052 = vrcp.pop %v900
  %v1053 = vmul.f32 1.0, %v1052
  %v1054 = vrcp.pop %v901
  %v1055 = vmul.f32 1.0, %v1054
  %v1056 = vrcp.pop %v902
  %v1057 = vmul.f32 1.0, %v1056
  %v1058 = vrcp.pop %v903
  %v1059 = vmul.f32 1.0, %v1058
  %v1060 = vrcp.pop %v904
  %v1061 = vmul.f32 1.0, %v1060
  %v1062 = vrcp.pop %v905
  %v1063 = vmul.f32 1.0, %v1062
  %v1064 = vrcp.pop %v906
  %v1065 = vmul.f32 1.0, %v1064
  %v1066 = vrcp.pop %v907
  %v1067 = vmul.f32 1.0, %v1066
  %v1068 = vld [vmem:[%s3] sm:$0xff]
  %v1069 = vld [vmem:[%s3 + $0x8] sm:$0xff]
  %v1070 = vld [vmem:[%s3 + $0x10] sm:$0xff]
  %v1071 = vld [vmem:[%s3 + $0x18] sm:$0xff]
  %v1072 = vld [vmem:[%s3 + $0x20] sm:$0xff]
  %v1073 = vld [vmem:[%s3 + $0x28] sm:$0xff]
  %v1074 = vld [vmem:[%s3 + $0x30] sm:$0xff]
  %v1075 = vld [vmem:[%s3 + $0x38] sm:$0xff]
  %v1076 = vld [vmem:[%s3 + $0x40] sm:$0xff]
  %v1077 = vld [vmem:[%s3 + $0x48] sm:$0xff]
  %v1078 = vld [vmem:[%s3 + $0x50] sm:$0xff]
  %v1079 = vld [vmem:[%s3 + $0x58] sm:$0xff]
  %v1080 = vld [vmem:[%s3 + $0x60] sm:$0xff]
  %v1081 = vld [vmem:[%s3 + $0x68] sm:$0xff]
  %v1082 = vld [vmem:[%s3 + $0x70] sm:$0xff]
  %v1083 = vld [vmem:[%s3 + $0x78] sm:$0xff]
  %v1084 = vld [vmem:[%s3 + $0x80] sm:$0xff]
  %v1085 = vld [vmem:[%s3 + $0x88] sm:$0xff]
  %v1086 = vld [vmem:[%s3 + $0x90] sm:$0xff]
  %v1087 = vld [vmem:[%s3 + $0x98] sm:$0xff]
  %v1088 = vld [vmem:[%s3 + $0xa0] sm:$0xff]
  %v1089 = vld [vmem:[%s3 + $0xa8] sm:$0xff]
  %v1090 = vld [vmem:[%s3 + $0xb0] sm:$0xff]
  %v1091 = vld [vmem:[%s3 + $0xb8] sm:$0xff]
  %v1092 = vld [vmem:[%s3 + $0xc0] sm:$0xff]
  %v1093 = vld [vmem:[%s3 + $0xc8] sm:$0xff]
  %v1094 = vld [vmem:[%s3 + $0xd0] sm:$0xff]
  %v1095 = vld [vmem:[%s3 + $0xd8] sm:$0xff]
  %v1096 = vld [vmem:[%s3 + $0xe0] sm:$0xff]
  %v1097 = vld [vmem:[%s3 + $0xe8] sm:$0xff]
  %v1098 = vld [vmem:[%s3 + $0xf0] sm:$0xff]
  %v1099 = vld [vmem:[%s3 + $0xf8] sm:$0xff]
  %v1100 = vld [vmem:[%s3 + $0x100] sm:$0xff]
  %v1101 = vld [vmem:[%s3 + $0x108] sm:$0xff]
  %v1102 = vld [vmem:[%s3 + $0x110] sm:$0xff]
  %v1103 = vld [vmem:[%s3 + $0x118] sm:$0xff]
  %v1104 = vld [vmem:[%s3 + $0x120] sm:$0xff]
  %v1105 = vld [vmem:[%s3 + $0x128] sm:$0xff]
  %v1106 = vld [vmem:[%s3 + $0x130] sm:$0xff]
  %v1107 = vld [vmem:[%s3 + $0x138] sm:$0xff]
  %v1108 = vld [vmem:[%s3 + $0x140] sm:$0xff]
  %v1109 = vld [vmem:[%s3 + $0x148] sm:$0xff]
  %v1110 = vld [vmem:[%s3 + $0x150] sm:$0xff]
  %v1111 = vld [vmem:[%s3 + $0x158] sm:$0xff]
  %v1112 = vld [vmem:[%s3 + $0x160] sm:$0xff]
  %v1113 = vld [vmem:[%s3 + $0x168] sm:$0xff]
  %v1114 = vld [vmem:[%s3 + $0x170] sm:$0xff]
  %v1115 = vld [vmem:[%s3 + $0x178] sm:$0xff]
  %v1116 = vld [vmem:[%s3 + $0x180] sm:$0xff]
  %v1117 = vld [vmem:[%s3 + $0x188] sm:$0xff]
  %v1118 = vld [vmem:[%s3 + $0x190] sm:$0xff]
  %v1119 = vld [vmem:[%s3 + $0x198] sm:$0xff]
  %v1120 = vld [vmem:[%s3 + $0x1a0] sm:$0xff]
  %v1121 = vld [vmem:[%s3 + $0x1a8] sm:$0xff]
  %v1122 = vld [vmem:[%s3 + $0x1b0] sm:$0xff]
  %v1123 = vld [vmem:[%s3 + $0x1b8] sm:$0xff]
  %v1124 = vld [vmem:[%s3 + $0x1c0] sm:$0xff]
  %v1125 = vld [vmem:[%s3 + $0x1c8] sm:$0xff]
  %v1126 = vld [vmem:[%s3 + $0x1d0] sm:$0xff]
  %v1127 = vld [vmem:[%s3 + $0x1d8] sm:$0xff]
  %v1128 = vld [vmem:[%s3 + $0x1e0] sm:$0xff]
  %v1129 = vld [vmem:[%s3 + $0x1e8] sm:$0xff]
  %v1130 = vld [vmem:[%s3 + $0x1f0] sm:$0xff]
  %v1131 = vld [vmem:[%s3 + $0x1f8] sm:$0xff]
  %v1132 = vld [vmem:[%s3 + $0x200] sm:$0xff]
  %v1133 = vld [vmem:[%s3 + $0x208] sm:$0xff]
  %v1134 = vld [vmem:[%s3 + $0x210] sm:$0xff]
  %v1135 = vld [vmem:[%s3 + $0x218] sm:$0xff]
  %v1136 = vld [vmem:[%s3 + $0x220] sm:$0xff]
  %v1137 = vld [vmem:[%s3 + $0x228] sm:$0xff]
  %v1138 = vld [vmem:[%s3 + $0x230] sm:$0xff]
  %v1139 = vld [vmem:[%s3 + $0x238] sm:$0xff]
  %v1140 = vld [vmem:[%s3 + $0x240] sm:$0xff]
  %v1141 = vld [vmem:[%s3 + $0x248] sm:$0xff]
  %v1142 = vld [vmem:[%s3 + $0x250] sm:$0xff]
  %v1143 = vld [vmem:[%s3 + $0x258] sm:$0xff]
  %v1144 = vld [vmem:[%s3 + $0x260] sm:$0xff]
  %v1145 = vld [vmem:[%s3 + $0x268] sm:$0xff]
  %v1146 = vld [vmem:[%s3 + $0x270] sm:$0xff]
  %v1147 = vld [vmem:[%s3 + $0x278] sm:$0xff]
  %v1148 = vld [vmem:[%s3 + $0x280] sm:$0xff]
  %v1149 = vld [vmem:[%s3 + $0x288] sm:$0xff]
  %v1150 = vld [vmem:[%s3 + $0x290] sm:$0xff]
  %v1151 = vld [vmem:[%s3 + $0x298] sm:$0xff]
  %v1152 = vld [vmem:[%s3 + $0x2a0] sm:$0xff]
  %v1153 = vld [vmem:[%s3 + $0x2a8] sm:$0xff]
  %v1154 = vld [vmem:[%s3 + $0x2b0] sm:$0xff]
  %v1155 = vld [vmem:[%s3 + $0x2b8] sm:$0xff]
  %v1156 = vld [vmem:[%s3 + $0x2c0] sm:$0xff]
  %v1157 = vld [vmem:[%s3 + $0x2c8] sm:$0xff]
  %v1158 = vld [vmem:[%s3 + $0x2d0] sm:$0xff]
  %v1159 = vld [vmem:[%s3 + $0x2d8] sm:$0xff]
  %v1160 = vld [vmem:[%s3 + $0x2e0] sm:$0xff]
  %v1161 = vld [vmem:[%s3 + $0x2e8] sm:$0xff]
  %v1162 = vld [vmem:[%s3 + $0x2f0] sm:$0xff]
  %v1163 = vld [vmem:[%s3 + $0x2f8] sm:$0xff]
  %v1164 = vld [vmem:[%s3 + $0x300] sm:$0xff]
  %v1165 = vld [vmem:[%s3 + $0x308] sm:$0xff]
  %v1166 = vld [vmem:[%s3 + $0x310] sm:$0xff]
  %v1167 = vld [vmem:[%s3 + $0x318] sm:$0xff]
  %v1168 = vld [vmem:[%s3 + $0x320] sm:$0xff]
  %v1169 = vld [vmem:[%s3 + $0x328] sm:$0xff]
  %v1170 = vld [vmem:[%s3 + $0x330] sm:$0xff]
  %v1171 = vld [vmem:[%s3 + $0x338] sm:$0xff]
  %v1172 = vld [vmem:[%s3 + $0x340] sm:$0xff]
  %v1173 = vld [vmem:[%s3 + $0x348] sm:$0xff]
  %v1174 = vld [vmem:[%s3 + $0x350] sm:$0xff]
  %v1175 = vld [vmem:[%s3 + $0x358] sm:$0xff]
  %v1176 = vld [vmem:[%s3 + $0x360] sm:$0xff]
  %v1177 = vld [vmem:[%s3 + $0x368] sm:$0xff]
  %v1178 = vld [vmem:[%s3 + $0x370] sm:$0xff]
  %v1179 = vld [vmem:[%s3 + $0x378] sm:$0xff]
  %v1180 = vld [vmem:[%s3 + $0x380] sm:$0xff]
  %v1181 = vld [vmem:[%s3 + $0x388] sm:$0xff]
  %v1182 = vld [vmem:[%s3 + $0x390] sm:$0xff]
  %v1183 = vld [vmem:[%s3 + $0x398] sm:$0xff]
  %v1184 = vld [vmem:[%s3 + $0x3a0] sm:$0xff]
  %v1185 = vld [vmem:[%s3 + $0x3a8] sm:$0xff]
  %v1186 = vld [vmem:[%s3 + $0x3b0] sm:$0xff]
  %v1187 = vld [vmem:[%s3 + $0x3b8] sm:$0xff]
  %v1188 = vld [vmem:[%s3 + $0x3c0] sm:$0xff]
  %v1189 = vld [vmem:[%s3 + $0x3c8] sm:$0xff]
  %v1190 = vld [vmem:[%s3 + $0x3d0] sm:$0xff]
  %v1191 = vld [vmem:[%s3 + $0x3d8] sm:$0xff]
  %v1192 = vld [vmem:[%s3 + $0x3e0] sm:$0xff]
  %v1193 = vld [vmem:[%s3 + $0x3e8] sm:$0xff]
  %v1194 = vld [vmem:[%s3 + $0x3f0] sm:$0xff]
  %v1195 = vld [vmem:[%s3 + $0x3f8] sm:$0xff]
  %v1196 = vld [vmem:[%s3 + $0x400] sm:$0xff]
  %v1197 = vld [vmem:[%s3 + $0x408] sm:$0xff]
  %v1198 = vld [vmem:[%s3 + $0x410] sm:$0xff]
  %v1199 = vld [vmem:[%s3 + $0x418] sm:$0xff]
  %v1200 = vld [vmem:[%s3 + $0x420] sm:$0xff]
  %v1201 = vld [vmem:[%s3 + $0x428] sm:$0xff]
  %v1202 = vld [vmem:[%s3 + $0x430] sm:$0xff]
  %v1203 = vld [vmem:[%s3 + $0x438] sm:$0xff]
  %v1204 = vld [vmem:[%s3 + $0x440] sm:$0xff]
  %v1205 = vld [vmem:[%s3 + $0x448] sm:$0xff]
  %v1206 = vld [vmem:[%s3 + $0x450] sm:$0xff]
  %v1207 = vld [vmem:[%s3 + $0x458] sm:$0xff]
  %v1208 = vld [vmem:[%s3 + $0x460] sm:$0xff]
  %v1209 = vld [vmem:[%s3 + $0x468] sm:$0xff]
  %v1210 = vld [vmem:[%s3 + $0x470] sm:$0xff]
  %v1211 = vld [vmem:[%s3 + $0x478] sm:$0xff]
  %v1212 = vld [vmem:[%s3 + $0x480] sm:$0xff]
  %v1213 = vld [vmem:[%s3 + $0x488] sm:$0xff]
  %v1214 = vld [vmem:[%s3 + $0x490] sm:$0xff]
  %v1215 = vld [vmem:[%s3 + $0x498] sm:$0xff]
  %v1216 = vld [vmem:[%s3 + $0x4a0] sm:$0xff]
  %v1217 = vld [vmem:[%s3 + $0x4a8] sm:$0xff]
  %v1218 = vld [vmem:[%s3 + $0x4b0] sm:$0xff]
  %v1219 = vld [vmem:[%s3 + $0x4b8] sm:$0xff]
  %v1220 = vld [vmem:[%s3 + $0x4c0] sm:$0xff]
  %v1221 = vld [vmem:[%s3 + $0x4c8] sm:$0xff]
  %v1222 = vld [vmem:[%s3 + $0x4d0] sm:$0xff]
  %v1223 = vld [vmem:[%s3 + $0x4d8] sm:$0xff]
  %v1224 = vld [vmem:[%s3 + $0x4e0] sm:$0xff]
  %v1225 = vld [vmem:[%s3 + $0x4e8] sm:$0xff]
  %v1226 = vld [vmem:[%s3 + $0x4f0] sm:$0xff]
  %v1227 = vld [vmem:[%s3 + $0x4f8] sm:$0xff]
  %1229 = vset.pattern.permute.xlu0 0
  %1230 = vperm.xlu0 %1229, %v909
  %v1231 = vpop.permute.xlu0 %1230
  %1234 = vset.pattern.permute.xlu0 0
  %1235 = vperm.xlu0 %1234, %v911
  %v1236 = vpop.permute.xlu0 %1235
  %1239 = vset.pattern.permute.xlu0 0
  %1240 = vperm.xlu0 %1239, %v913
  %v1241 = vpop.permute.xlu0 %1240
  %1244 = vset.pattern.permute.xlu0 0
  %1245 = vperm.xlu0 %1244, %v915
  %v1246 = vpop.permute.xlu0 %1245
  %1249 = vset.pattern.permute.xlu0 0
  %1250 = vperm.xlu0 %1249, %v917
  %v1251 = vpop.permute.xlu0 %1250
  %1254 = vset.pattern.permute.xlu0 0
  %1255 = vperm.xlu0 %1254, %v919
  %v1256 = vpop.permute.xlu0 %1255
  %1259 = vset.pattern.permute.xlu0 0
  %1260 = vperm.xlu0 %1259, %v921
  %v1261 = vpop.permute.xlu0 %1260
  %1264 = vset.pattern.permute.xlu0 0
  %1265 = vperm.xlu0 %1264, %v923
  %v1266 = vpop.permute.xlu0 %1265
  %1269 = vset.pattern.permute.xlu0 0
  %1270 = vperm.xlu0 %1269, %v925
  %v1271 = vpop.permute.xlu0 %1270
  %1274 = vset.pattern.permute.xlu0 0
  %1275 = vperm.xlu0 %1274, %v927
  %v1276 = vpop.permute.xlu0 %1275
  %1279 = vset.pattern.permute.xlu0 0
  %1280 = vperm.xlu0 %1279, %v929
  %v1281 = vpop.permute.xlu0 %1280
  %1284 = vset.pattern.permute.xlu0 0
  %1285 = vperm.xlu0 %1284, %v931
  %v1286 = vpop.permute.xlu0 %1285
  %1289 = vset.pattern.permute.xlu0 0
  %1290 = vperm.xlu0 %1289, %v933
  %v1291 = vpop.permute.xlu0 %1290
  %1294 = vset.pattern.permute.xlu0 0
  %1295 = vperm.xlu0 %1294, %v935
  %v1296 = vpop.permute.xlu0 %1295
  %1299 = vset.pattern.permute.xlu0 0
  %1300 = vperm.xlu0 %1299, %v937
  %v1301 = vpop.permute.xlu0 %1300
  %1304 = vset.pattern.permute.xlu0 0
  %1305 = vperm.xlu0 %1304, %v939
  %v1306 = vpop.permute.xlu0 %1305
  %1309 = vset.pattern.permute.xlu0 0
  %1310 = vperm.xlu0 %1309, %v941
  %v1311 = vpop.permute.xlu0 %1310
  %1314 = vset.pattern.permute.xlu0 0
  %1315 = vperm.xlu0 %1314, %v943
  %v1316 = vpop.permute.xlu0 %1315
  %1319 = vset.pattern.permute.xlu0 0
  %1320 = vperm.xlu0 %1319, %v945
  %v1321 = vpop.permute.xlu0 %1320
  %1324 = vset.pattern.permute.xlu0 0
  %1325 = vperm.xlu0 %1324, %v947
  %v1326 = vpop.permute.xlu0 %1325
  %1329 = vset.pattern.permute.xlu0 0
  %1330 = vperm.xlu0 %1329, %v949
  %v1331 = vpop.permute.xlu0 %1330
  %1334 = vset.pattern.permute.xlu0 0
  %1335 = vperm.xlu0 %1334, %v951
  %v1336 = vpop.permute.xlu0 %1335
  %1339 = vset.pattern.permute.xlu0 0
  %1340 = vperm.xlu0 %1339, %v953
  %v1341 = vpop.permute.xlu0 %1340
  %1344 = vset.pattern.permute.xlu0 0
  %1345 = vperm.xlu0 %1344, %v955
  %v1346 = vpop.permute.xlu0 %1345
  %1349 = vset.pattern.permute.xlu0 0
  %1350 = vperm.xlu0 %1349, %v957
  %v1351 = vpop.permute.xlu0 %1350
  %1354 = vset.pattern.permute.xlu0 0
  %1355 = vperm.xlu0 %1354, %v959
  %v1356 = vpop.permute.xlu0 %1355
  %1359 = vset.pattern.permute.xlu0 0
  %1360 = vperm.xlu0 %1359, %v961
  %v1361 = vpop.permute.xlu0 %1360
  %1364 = vset.pattern.permute.xlu0 0
  %1365 = vperm.xlu0 %1364, %v963
  %v1366 = vpop.permute.xlu0 %1365
  %1369 = vset.pattern.permute.xlu0 0
  %1370 = vperm.xlu0 %1369, %v965
  %v1371 = vpop.permute.xlu0 %1370
  %1374 = vset.pattern.permute.xlu0 0
  %1375 = vperm.xlu0 %1374, %v967
  %v1376 = vpop.permute.xlu0 %1375
  %1379 = vset.pattern.permute.xlu0 0
  %1380 = vperm.xlu0 %1379, %v969
  %v1381 = vpop.permute.xlu0 %1380
  %1384 = vset.pattern.permute.xlu0 0
  %1385 = vperm.xlu0 %1384, %v971
  %v1386 = vpop.permute.xlu0 %1385
  %1389 = vset.pattern.permute.xlu0 0
  %1390 = vperm.xlu0 %1389, %v973
  %v1391 = vpop.permute.xlu0 %1390
  %1394 = vset.pattern.permute.xlu0 0
  %1395 = vperm.xlu0 %1394, %v975
  %v1396 = vpop.permute.xlu0 %1395
  %1399 = vset.pattern.permute.xlu0 0
  %1400 = vperm.xlu0 %1399, %v977
  %v1401 = vpop.permute.xlu0 %1400
  %1404 = vset.pattern.permute.xlu0 0
  %1405 = vperm.xlu0 %1404, %v979
  %v1406 = vpop.permute.xlu0 %1405
  %1409 = vset.pattern.permute.xlu0 0
  %1410 = vperm.xlu0 %1409, %v981
  %v1411 = vpop.permute.xlu0 %1410
  %1414 = vset.pattern.permute.xlu0 0
  %1415 = vperm.xlu0 %1414, %v983
  %v1416 = vpop.permute.xlu0 %1415
  %1419 = vset.pattern.permute.xlu0 0
  %1420 = vperm.xlu0 %1419, %v985
  %v1421 = vpop.permute.xlu0 %1420
  %1424 = vset.pattern.permute.xlu0 0
  %1425 = vperm.xlu0 %1424, %v987
  %v1426 = vpop.permute.xlu0 %1425
  %1429 = vset.pattern.permute.xlu0 0
  %1430 = vperm.xlu0 %1429, %v989
  %v1431 = vpop.permute.xlu0 %1430
  %1434 = vset.pattern.permute.xlu0 0
  %1435 = vperm.xlu0 %1434, %v991
  %v1436 = vpop.permute.xlu0 %1435
  %1439 = vset.pattern.permute.xlu0 0
  %1440 = vperm.xlu0 %1439, %v993
  %v1441 = vpop.permute.xlu0 %1440
  %1444 = vset.pattern.permute.xlu0 0
  %1445 = vperm.xlu0 %1444, %v995
  %v1446 = vpop.permute.xlu0 %1445
  %1449 = vset.pattern.permute.xlu0 0
  %1450 = vperm.xlu0 %1449, %v997
  %v1451 = vpop.permute.xlu0 %1450
  %1454 = vset.pattern.permute.xlu0 0
  %1455 = vperm.xlu0 %1454, %v999
  %v1456 = vpop.permute.xlu0 %1455
  %1459 = vset.pattern.permute.xlu0 0
  %1460 = vperm.xlu0 %1459, %v1001
  %v1461 = vpop.permute.xlu0 %1460
  %1464 = vset.pattern.permute.xlu0 0
  %1465 = vperm.xlu0 %1464, %v1003
  %v1466 = vpop.permute.xlu0 %1465
  %1469 = vset.pattern.permute.xlu0 0
  %1470 = vperm.xlu0 %1469, %v1005
  %v1471 = vpop.permute.xlu0 %1470
  %1474 = vset.pattern.permute.xlu0 0
  %1475 = vperm.xlu0 %1474, %v1007
  %v1476 = vpop.permute.xlu0 %1475
  %1479 = vset.pattern.permute.xlu0 0
  %1480 = vperm.xlu0 %1479, %v1009
  %v1481 = vpop.permute.xlu0 %1480
  %1484 = vset.pattern.permute.xlu0 0
  %1485 = vperm.xlu0 %1484, %v1011
  %v1486 = vpop.permute.xlu0 %1485
  %1489 = vset.pattern.permute.xlu0 0
  %1490 = vperm.xlu0 %1489, %v1013
  %v1491 = vpop.permute.xlu0 %1490
  %1494 = vset.pattern.permute.xlu0 0
  %1495 = vperm.xlu0 %1494, %v1015
  %v1496 = vpop.permute.xlu0 %1495
  %1499 = vset.pattern.permute.xlu0 0
  %1500 = vperm.xlu0 %1499, %v1017
  %v1501 = vpop.permute.xlu0 %1500
  %1504 = vset.pattern.permute.xlu0 0
  %1505 = vperm.xlu0 %1504, %v1019
  %v1506 = vpop.permute.xlu0 %1505
  %1509 = vset.pattern.permute.xlu0 0
  %1510 = vperm.xlu0 %1509, %v1021
  %v1511 = vpop.permute.xlu0 %1510
  %1514 = vset.pattern.permute.xlu0 0
  %1515 = vperm.xlu0 %1514, %v1023
  %v1516 = vpop.permute.xlu0 %1515
  %1519 = vset.pattern.permute.xlu0 0
  %1520 = vperm.xlu0 %1519, %v1025
  %v1521 = vpop.permute.xlu0 %1520
  %1524 = vset.pattern.permute.xlu0 0
  %1525 = vperm.xlu0 %1524, %v1027
  %v1526 = vpop.permute.xlu0 %1525
  %1529 = vset.pattern.permute.xlu0 0
  %1530 = vperm.xlu0 %1529, %v1029
  %v1531 = vpop.permute.xlu0 %1530
  %1534 = vset.pattern.permute.xlu0 0
  %1535 = vperm.xlu0 %1534, %v1031
  %v1536 = vpop.permute.xlu0 %1535
  %1539 = vset.pattern.permute.xlu0 0
  %1540 = vperm.xlu0 %1539, %v1033
  %v1541 = vpop.permute.xlu0 %1540
  %1544 = vset.pattern.permute.xlu0 0
  %1545 = vperm.xlu0 %1544, %v1035
  %v1546 = vpop.permute.xlu0 %1545
  %1549 = vset.pattern.permute.xlu0 0
  %1550 = vperm.xlu0 %1549, %v1037
  %v1551 = vpop.permute.xlu0 %1550
  %1554 = vset.pattern.permute.xlu0 0
  %1555 = vperm.xlu0 %1554, %v1039
  %v1556 = vpop.permute.xlu0 %1555
  %1559 = vset.pattern.permute.xlu0 0
  %1560 = vperm.xlu0 %1559, %v1041
  %v1561 = vpop.permute.xlu0 %1560
  %1564 = vset.pattern.permute.xlu0 0
  %1565 = vperm.xlu0 %1564, %v1043
  %v1566 = vpop.permute.xlu0 %1565
  %1569 = vset.pattern.permute.xlu0 0
  %1570 = vperm.xlu0 %1569, %v1045
  %v1571 = vpop.permute.xlu0 %1570
  %1574 = vset.pattern.permute.xlu0 0
  %1575 = vperm.xlu0 %1574, %v1047
  %v1576 = vpop.permute.xlu0 %1575
  %1579 = vset.pattern.permute.xlu0 0
  %1580 = vperm.xlu0 %1579, %v1049
  %v1581 = vpop.permute.xlu0 %1580
  %1584 = vset.pattern.permute.xlu0 0
  %1585 = vperm.xlu0 %1584, %v1051
  %v1586 = vpop.permute.xlu0 %1585
  %1589 = vset.pattern.permute.xlu0 0
  %1590 = vperm.xlu0 %1589, %v1053
  %v1591 = vpop.permute.xlu0 %1590
  %1594 = vset.pattern.permute.xlu0 0
  %1595 = vperm.xlu0 %1594, %v1055
  %v1596 = vpop.permute.xlu0 %1595
  %1599 = vset.pattern.permute.xlu0 0
  %1600 = vperm.xlu0 %1599, %v1057
  %v1601 = vpop.permute.xlu0 %1600
  %1604 = vset.pattern.permute.xlu0 0
  %1605 = vperm.xlu0 %1604, %v1059
  %v1606 = vpop.permute.xlu0 %1605
  %1609 = vset.pattern.permute.xlu0 0
  %1610 = vperm.xlu0 %1609, %v1061
  %v1611 = vpop.permute.xlu0 %1610
  %1614 = vset.pattern.permute.xlu0 0
  %1615 = vperm.xlu0 %1614, %v1063
  %v1616 = vpop.permute.xlu0 %1615
  %1619 = vset.pattern.permute.xlu0 0
  %1620 = vperm.xlu0 %1619, %v1065
  %v1621 = vpop.permute.xlu0 %1620
  %1624 = vset.pattern.permute.xlu0 0
  %1625 = vperm.xlu0 %1624, %v1067
  %v1626 = vpop.permute.xlu0 %1625
  %v1628 = vmul.f32 %v1068, %v1231
  %v1629 = vmul.f32 %v1069, %v1231
  %v1630 = vmul.f32 %v1070, %v1236
  %v1631 = vmul.f32 %v1071, %v1236
  %v1632 = vmul.f32 %v1072, %v1241
  %v1633 = vmul.f32 %v1073, %v1241
  %v1634 = vmul.f32 %v1074, %v1246
  %v1635 = vmul.f32 %v1075, %v1246
  %v1636 = vmul.f32 %v1076, %v1251
  %v1637 = vmul.f32 %v1077, %v1251
  %v1638 = vmul.f32 %v1078, %v1256
  %v1639 = vmul.f32 %v1079, %v1256
  %v1640 = vmul.f32 %v1080, %v1261
  %v1641 = vmul.f32 %v1081, %v1261
  %v1642 = vmul.f32 %v1082, %v1266
  %v1643 = vmul.f32 %v1083, %v1266
  %v1644 = vmul.f32 %v1084, %v1271
  %v1645 = vmul.f32 %v1085, %v1271
  %v1646 = vmul.f32 %v1086, %v1276
  %v1647 = vmul.f32 %v1087, %v1276
  %v1648 = vmul.f32 %v1088, %v1281
  %v1649 = vmul.f32 %v1089, %v1281
  %v1650 = vmul.f32 %v1090, %v1286
  %v1651 = vmul.f32 %v1091, %v1286
  %v1652 = vmul.f32 %v1092, %v1291
  %v1653 = vmul.f32 %v1093, %v1291
  %v1654 = vmul.f32 %v1094, %v1296
  %v1655 = vmul.f32 %v1095, %v1296
  %v1656 = vmul.f32 %v1096, %v1301
  %v1657 = vmul.f32 %v1097, %v1301
  %v1658 = vmul.f32 %v1098, %v1306
  %v1659 = vmul.f32 %v1099, %v1306
  %v1660 = vmul.f32 %v1100, %v1311
  %v1661 = vmul.f32 %v1101, %v1311
  %v1662 = vmul.f32 %v1102, %v1316
  %v1663 = vmul.f32 %v1103, %v1316
  %v1664 = vmul.f32 %v1104, %v1321
  %v1665 = vmul.f32 %v1105, %v1321
  %v1666 = vmul.f32 %v1106, %v1326
  %v1667 = vmul.f32 %v1107, %v1326
  %v1668 = vmul.f32 %v1108, %v1331
  %v1669 = vmul.f32 %v1109, %v1331
  %v1670 = vmul.f32 %v1110, %v1336
  %v1671 = vmul.f32 %v1111, %v1336
  %v1672 = vmul.f32 %v1112, %v1341
  %v1673 = vmul.f32 %v1113, %v1341
  %v1674 = vmul.f32 %v1114, %v1346
  %v1675 = vmul.f32 %v1115, %v1346
  %v1676 = vmul.f32 %v1116, %v1351
  %v1677 = vmul.f32 %v1117, %v1351
  %v1678 = vmul.f32 %v1118, %v1356
  %v1679 = vmul.f32 %v1119, %v1356
  %v1680 = vmul.f32 %v1120, %v1361
  %v1681 = vmul.f32 %v1121, %v1361
  %v1682 = vmul.f32 %v1122, %v1366
  %v1683 = vmul.f32 %v1123, %v1366
  %v1684 = vmul.f32 %v1124, %v1371
  %v1685 = vmul.f32 %v1125, %v1371
  %v1686 = vmul.f32 %v1126, %v1376
  %v1687 = vmul.f32 %v1127, %v1376
  %v1688 = vmul.f32 %v1128, %v1381
  %v1689 = vmul.f32 %v1129, %v1381
  %v1690 = vmul.f32 %v1130, %v1386
  %v1691 = vmul.f32 %v1131, %v1386
  %v1692 = vmul.f32 %v1132, %v1391
  %v1693 = vmul.f32 %v1133, %v1391
  %v1694 = vmul.f32 %v1134, %v1396
  %v1695 = vmul.f32 %v1135, %v1396
  %v1696 = vmul.f32 %v1136, %v1401
  %v1697 = vmul.f32 %v1137, %v1401
  %v1698 = vmul.f32 %v1138, %v1406
  %v1699 = vmul.f32 %v1139, %v1406
  %v1700 = vmul.f32 %v1140, %v1411
  %v1701 = vmul.f32 %v1141, %v1411
  %v1702 = vmul.f32 %v1142, %v1416
  %v1703 = vmul.f32 %v1143, %v1416
  %v1704 = vmul.f32 %v1144, %v1421
  %v1705 = vmul.f32 %v1145, %v1421
  %v1706 = vmul.f32 %v1146, %v1426
  %v1707 = vmul.f32 %v1147, %v1426
  %v1708 = vmul.f32 %v1148, %v1431
  %v1709 = vmul.f32 %v1149, %v1431
  %v1710 = vmul.f32 %v1150, %v1436
  %v1711 = vmul.f32 %v1151, %v1436
  %v1712 = vmul.f32 %v1152, %v1441
  %v1713 = vmul.f32 %v1153, %v1441
  %v1714 = vmul.f32 %v1154, %v1446
  %v1715 = vmul.f32 %v1155, %v1446
  %v1716 = vmul.f32 %v1156, %v1451
  %v1717 = vmul.f32 %v1157, %v1451
  %v1718 = vmul.f32 %v1158, %v1456
  %v1719 = vmul.f32 %v1159, %v1456
  %v1720 = vmul.f32 %v1160, %v1461
  %v1721 = vmul.f32 %v1161, %v1461
  %v1722 = vmul.f32 %v1162, %v1466
  %v1723 = vmul.f32 %v1163, %v1466
  %v1724 = vmul.f32 %v1164, %v1471
  %v1725 = vmul.f32 %v1165, %v1471
  %v1726 = vmul.f32 %v1166, %v1476
  %v1727 = vmul.f32 %v1167, %v1476
  %v1728 = vmul.f32 %v1168, %v1481
  %v1729 = vmul.f32 %v1169, %v1481
  %v1730 = vmul.f32 %v1170, %v1486
  %v1731 = vmul.f32 %v1171, %v1486
  %v1732 = vmul.f32 %v1172, %v1491
  %v1733 = vmul.f32 %v1173, %v1491
  %v1734 = vmul.f32 %v1174, %v1496
  %v1735 = vmul.f32 %v1175, %v1496
  %v1736 = vmul.f32 %v1176, %v1501
  %v1737 = vmul.f32 %v1177, %v1501
  %v1738 = vmul.f32 %v1178, %v1506
  %v1739 = vmul.f32 %v1179, %v1506
  %v1740 = vmul.f32 %v1180, %v1511
  %v1741 = vmul.f32 %v1181, %v1511
  %v1742 = vmul.f32 %v1182, %v1516
  %v1743 = vmul.f32 %v1183, %v1516
  %v1744 = vmul.f32 %v1184, %v1521
  %v1745 = vmul.f32 %v1185, %v1521
  %v1746 = vmul.f32 %v1186, %v1526
  %v1747 = vmul.f32 %v1187, %v1526
  %v1748 = vmul.f32 %v1188, %v1531
  %v1749 = vmul.f32 %v1189, %v1531
  %v1750 = vmul.f32 %v1190, %v1536
  %v1751 = vmul.f32 %v1191, %v1536
  %v1752 = vmul.f32 %v1192, %v1541
  %v1753 = vmul.f32 %v1193, %v1541
  %v1754 = vmul.f32 %v1194, %v1546
  %v1755 = vmul.f32 %v1195, %v1546
  %v1756 = vmul.f32 %v1196, %v1551
  %v1757 = vmul.f32 %v1197, %v1551
  %v1758 = vmul.f32 %v1198, %v1556
  %v1759 = vmul.f32 %v1199, %v1556
  %v1760 = vmul.f32 %v1200, %v1561
  %v1761 = vmul.f32 %v1201, %v1561
  %v1762 = vmul.f32 %v1202, %v1566
  %v1763 = vmul.f32 %v1203, %v1566
  %v1764 = vmul.f32 %v1204, %v1571
  %v1765 = vmul.f32 %v1205, %v1571
  %v1766 = vmul.f32 %v1206, %v1576
  %v1767 = vmul.f32 %v1207, %v1576
  %v1768 = vmul.f32 %v1208, %v1581
  %v1769 = vmul.f32 %v1209, %v1581
  %v1770 = vmul.f32 %v1210, %v1586
  %v1771 = vmul.f32 %v1211, %v1586
  %v1772 = vmul.f32 %v1212, %v1591
  %v1773 = vmul.f32 %v1213, %v1591
  %v1774 = vmul.f32 %v1214, %v1596
  %v1775 = vmul.f32 %v1215, %v1596
  %v1776 = vmul.f32 %v1216, %v1601
  %v1777 = vmul.f32 %v1217, %v1601
  %v1778 = vmul.f32 %v1218, %v1606
  %v1779 = vmul.f32 %v1219, %v1606
  %v1780 = vmul.f32 %v1220, %v1611
  %v1781 = vmul.f32 %v1221, %v1611
  %v1782 = vmul.f32 %v1222, %v1616
  %v1783 = vmul.f32 %v1223, %v1616
  %v1784 = vmul.f32 %v1224, %v1621
  %v1785 = vmul.f32 %v1225, %v1621
  %v1786 = vmul.f32 %v1226, %v1626
  %v1787 = vmul.f32 %v1227, %v1626
  %v1788 = vld [vmem:[%s4] sm:$0xff]
  %v1789 = vld [vmem:[%s4 + $0x8] sm:$0xff]
  %v1790 = vld [vmem:[%s4 + $0x10] sm:$0xff]
  %v1791 = vld [vmem:[%s4 + $0x18] sm:$0xff]
  %v1792 = vld [vmem:[%s4 + $0x20] sm:$0xff]
  %v1793 = vld [vmem:[%s4 + $0x28] sm:$0xff]
  %v1794 = vld [vmem:[%s4 + $0x30] sm:$0xff]
  %v1795 = vld [vmem:[%s4 + $0x38] sm:$0xff]
  %v1796 = vld [vmem:[%s4 + $0x40] sm:$0xff]
  %v1797 = vld [vmem:[%s4 + $0x48] sm:$0xff]
  %v1798 = vld [vmem:[%s4 + $0x50] sm:$0xff]
  %v1799 = vld [vmem:[%s4 + $0x58] sm:$0xff]
  %v1800 = vld [vmem:[%s4 + $0x60] sm:$0xff]
  %v1801 = vld [vmem:[%s4 + $0x68] sm:$0xff]
  %v1802 = vld [vmem:[%s4 + $0x70] sm:$0xff]
  %v1803 = vld [vmem:[%s4 + $0x78] sm:$0xff]
  %v1804 = vld [vmem:[%s4 + $0x80] sm:$0xff]
  %v1805 = vld [vmem:[%s4 + $0x88] sm:$0xff]
  %v1806 = vld [vmem:[%s4 + $0x90] sm:$0xff]
  %v1807 = vld [vmem:[%s4 + $0x98] sm:$0xff]
  %v1808 = vld [vmem:[%s4 + $0xa0] sm:$0xff]
  %v1809 = vld [vmem:[%s4 + $0xa8] sm:$0xff]
  %v1810 = vld [vmem:[%s4 + $0xb0] sm:$0xff]
  %v1811 = vld [vmem:[%s4 + $0xb8] sm:$0xff]
  %v1812 = vld [vmem:[%s4 + $0xc0] sm:$0xff]
  %v1813 = vld [vmem:[%s4 + $0xc8] sm:$0xff]
  %v1814 = vld [vmem:[%s4 + $0xd0] sm:$0xff]
  %v1815 = vld [vmem:[%s4 + $0xd8] sm:$0xff]
  %v1816 = vld [vmem:[%s4 + $0xe0] sm:$0xff]
  %v1817 = vld [vmem:[%s4 + $0xe8] sm:$0xff]
  %v1818 = vld [vmem:[%s4 + $0xf0] sm:$0xff]
  %v1819 = vld [vmem:[%s4 + $0xf8] sm:$0xff]
  %v1820 = vld [vmem:[%s4 + $0x100] sm:$0xff]
  %v1821 = vld [vmem:[%s4 + $0x108] sm:$0xff]
  %v1822 = vld [vmem:[%s4 + $0x110] sm:$0xff]
  %v1823 = vld [vmem:[%s4 + $0x118] sm:$0xff]
  %v1824 = vld [vmem:[%s4 + $0x120] sm:$0xff]
  %v1825 = vld [vmem:[%s4 + $0x128] sm:$0xff]
  %v1826 = vld [vmem:[%s4 + $0x130] sm:$0xff]
  %v1827 = vld [vmem:[%s4 + $0x138] sm:$0xff]
  %v1828 = vld [vmem:[%s4 + $0x140] sm:$0xff]
  %v1829 = vld [vmem:[%s4 + $0x148] sm:$0xff]
  %v1830 = vld [vmem:[%s4 + $0x150] sm:$0xff]
  %v1831 = vld [vmem:[%s4 + $0x158] sm:$0xff]
  %v1832 = vld [vmem:[%s4 + $0x160] sm:$0xff]
  %v1833 = vld [vmem:[%s4 + $0x168] sm:$0xff]
  %v1834 = vld [vmem:[%s4 + $0x170] sm:$0xff]
  %v1835 = vld [vmem:[%s4 + $0x178] sm:$0xff]
  %v1836 = vld [vmem:[%s4 + $0x180] sm:$0xff]
  %v1837 = vld [vmem:[%s4 + $0x188] sm:$0xff]
  %v1838 = vld [vmem:[%s4 + $0x190] sm:$0xff]
  %v1839 = vld [vmem:[%s4 + $0x198] sm:$0xff]
  %v1840 = vld [vmem:[%s4 + $0x1a0] sm:$0xff]
  %v1841 = vld [vmem:[%s4 + $0x1a8] sm:$0xff]
  %v1842 = vld [vmem:[%s4 + $0x1b0] sm:$0xff]
  %v1843 = vld [vmem:[%s4 + $0x1b8] sm:$0xff]
  %v1844 = vld [vmem:[%s4 + $0x1c0] sm:$0xff]
  %v1845 = vld [vmem:[%s4 + $0x1c8] sm:$0xff]
  %v1846 = vld [vmem:[%s4 + $0x1d0] sm:$0xff]
  %v1847 = vld [vmem:[%s4 + $0x1d8] sm:$0xff]
  %v1848 = vld [vmem:[%s4 + $0x1e0] sm:$0xff]
  %v1849 = vld [vmem:[%s4 + $0x1e8] sm:$0xff]
  %v1850 = vld [vmem:[%s4 + $0x1f0] sm:$0xff]
  %v1851 = vld [vmem:[%s4 + $0x1f8] sm:$0xff]
  %v1852 = vld [vmem:[%s4 + $0x200] sm:$0xff]
  %v1853 = vld [vmem:[%s4 + $0x208] sm:$0xff]
  %v1854 = vld [vmem:[%s4 + $0x210] sm:$0xff]
  %v1855 = vld [vmem:[%s4 + $0x218] sm:$0xff]
  %v1856 = vld [vmem:[%s4 + $0x220] sm:$0xff]
  %v1857 = vld [vmem:[%s4 + $0x228] sm:$0xff]
  %v1858 = vld [vmem:[%s4 + $0x230] sm:$0xff]
  %v1859 = vld [vmem:[%s4 + $0x238] sm:$0xff]
  %v1860 = vld [vmem:[%s4 + $0x240] sm:$0xff]
  %v1861 = vld [vmem:[%s4 + $0x248] sm:$0xff]
  %v1862 = vld [vmem:[%s4 + $0x250] sm:$0xff]
  %v1863 = vld [vmem:[%s4 + $0x258] sm:$0xff]
  %v1864 = vld [vmem:[%s4 + $0x260] sm:$0xff]
  %v1865 = vld [vmem:[%s4 + $0x268] sm:$0xff]
  %v1866 = vld [vmem:[%s4 + $0x270] sm:$0xff]
  %v1867 = vld [vmem:[%s4 + $0x278] sm:$0xff]
  %v1868 = vld [vmem:[%s4 + $0x280] sm:$0xff]
  %v1869 = vld [vmem:[%s4 + $0x288] sm:$0xff]
  %v1870 = vld [vmem:[%s4 + $0x290] sm:$0xff]
  %v1871 = vld [vmem:[%s4 + $0x298] sm:$0xff]
  %v1872 = vld [vmem:[%s4 + $0x2a0] sm:$0xff]
  %v1873 = vld [vmem:[%s4 + $0x2a8] sm:$0xff]
  %v1874 = vld [vmem:[%s4 + $0x2b0] sm:$0xff]
  %v1875 = vld [vmem:[%s4 + $0x2b8] sm:$0xff]
  %v1876 = vld [vmem:[%s4 + $0x2c0] sm:$0xff]
  %v1877 = vld [vmem:[%s4 + $0x2c8] sm:$0xff]
  %v1878 = vld [vmem:[%s4 + $0x2d0] sm:$0xff]
  %v1879 = vld [vmem:[%s4 + $0x2d8] sm:$0xff]
  %v1880 = vld [vmem:[%s4 + $0x2e0] sm:$0xff]
  %v1881 = vld [vmem:[%s4 + $0x2e8] sm:$0xff]
  %v1882 = vld [vmem:[%s4 + $0x2f0] sm:$0xff]
  %v1883 = vld [vmem:[%s4 + $0x2f8] sm:$0xff]
  %v1884 = vld [vmem:[%s4 + $0x300] sm:$0xff]
  %v1885 = vld [vmem:[%s4 + $0x308] sm:$0xff]
  %v1886 = vld [vmem:[%s4 + $0x310] sm:$0xff]
  %v1887 = vld [vmem:[%s4 + $0x318] sm:$0xff]
  %1888 = vmatprep.subr.mxu0 %v1629
  %1889 = vmatpush1.msra.mxu0 %v1628
  %1890 = vmatprep.subr.mxu0 %v1631
  %1891 = vmatpush1.msra.mxu0 %v1630
  %1892 = vmatprep.subr.mxu0 %v1633
  %1893 = vmatpush1.msra.mxu0 %v1632
  %1894 = vmatprep.subr.mxu0 %v1635
  %1895 = vmatpush1.msra.mxu0 %v1634
  %1896 = vmatprep.subr.mxu0 %v1637
  %1897 = vmatpush1.msra.mxu0 %v1636
  %1898 = vmatprep.subr.mxu0 %v1639
  %1899 = vmatpush1.msra.mxu0 %v1638
  %1900 = vmatprep.subr.mxu0 %v1641
  %1901 = vmatpush1.msra.mxu0 %v1640
  %1902 = vmatprep.subr.mxu0 %v1643
  %1903 = vmatpush1.msra.mxu0 %v1642
  %1904 = vmatprep.subr.mxu0 %v1645
  %1905 = vmatpush1.msra.mxu0 %v1644
  %1906 = vmatprep.subr.mxu0 %v1647
  %1907 = vmatpush1.msra.mxu0 %v1646
  %1908 = vmatprep.subr.mxu0 %v1649
  %1909 = vmatpush1.msra.mxu0 %v1648
  %1910 = vmatprep.subr.mxu0 %v1651
  %1911 = vmatpush1.msra.mxu0 %v1650
  %1912 = vmatprep.subr.mxu0 %v1653
  %1913 = vmatpush1.msra.mxu0 %v1652
  %1914 = vmatprep.subr.mxu0 %v1655
  %1915 = vmatpush1.msra.mxu0 %v1654
  %1916 = vmatprep.subr.mxu0 %v1657
  %1917 = vmatpush1.msra.mxu0 %v1656
  %1918 = vmatprep.subr.mxu0 %v1659
  %1919 = vmatpush1.msra.mxu0 %v1658
  %1920 = vmatprep.subr.mxu0 %v1661
  %1921 = vmatpush1.msra.mxu0 %v1660
  %1922 = vmatprep.subr.mxu0 %v1663
  %1923 = vmatpush1.msra.mxu0 %v1662
  %1924 = vmatprep.subr.mxu0 %v1665
  %1925 = vmatpush1.msra.mxu0 %v1664
  %1926 = vmatprep.subr.mxu0 %v1667
  %1927 = vmatpush1.msra.mxu0 %v1666
  %1928 = vmatprep.subr.mxu0 %v1669
  %1929 = vmatpush1.msra.mxu0 %v1668
  %1930 = vmatprep.subr.mxu0 %v1671
  %1931 = vmatpush1.msra.mxu0 %v1670
  %1932 = vmatprep.subr.mxu0 %v1673
  %1933 = vmatpush1.msra.mxu0 %v1672
  %1934 = vmatprep.subr.mxu0 %v1675
  %1935 = vmatpush1.msra.mxu0 %v1674
  %1936 = vmatprep.subr.mxu0 %v1677
  %1937 = vmatpush1.msra.mxu0 %v1676
  %1938 = vmatprep.subr.mxu0 %v1679
  %1939 = vmatpush1.msra.mxu0 %v1678
  %1940 = vmatprep.subr.mxu0 %v1681
  %1941 = vmatpush1.msra.mxu0 %v1680
  %1942 = vmatprep.subr.mxu0 %v1683
  %1943 = vmatpush1.msra.mxu0 %v1682
  %1944 = vmatprep.subr.mxu0 %v1685
  %1945 = vmatpush1.msra.mxu0 %v1684
  %1946 = vmatprep.subr.mxu0 %v1687
  %1947 = vmatpush1.msra.mxu0 %v1686
  %1948 = vmatprep.subr.mxu0 %v1689
  %1949 = vmatpush1.msra.mxu0 %v1688
  %1950 = vmatprep.subr.mxu0 %v1691
  %1951 = vmatpush1.msra.mxu0 %v1690
  %1952 = vmatprep.mubr.f32.mxu0 %v1789
  %1953 = vmatmul.mubr.f32.gmra.mrb[0].mxu0 %v1788
  %v1954 = vpop.f32.mrb[0].mxu0
  %v1955 = vadd.f32 0.0, %v1954
  %v1956 = vpop.f32.mrb[0].mxu0
  %v1957 = vadd.f32 0.0, %v1956
  %1958 = vmatprep.mubr.f32.mxu0 %v1794
  %1959 = vmatmul.mubr.f32.gmra.mrb[0].mxu0 %v1793
  %v1960 = vpop.f32.mrb[0].mxu0
  %v1961 = vadd.f32 0.0, %v1960
  %v1962 = vpop.f32.mrb[0].mxu0
  %v1963 = vadd.f32 0.0, %v1962
  %1964 = vmatprep.mubr.f32.mxu0 %v1799
  %1965 = vmatmul.mubr.f32.gmra.mrb[0].mxu0 %v1798
  %v1966 = vpop.f32.mrb[0].mxu0
  %v1967 = vadd.f32 0.0, %v1966
  %v1968 = vpop.f32.mrb[0].mxu0
  %v1969 = vadd.f32 0.0, %v1968
  %1970 = vmatprep.mubr.f32.mxu0 %v1804
  %1971 = vmatmul.mubr.f32.gmra.mrb[0].mxu0 %v1803
  %v1972 = vpop.f32.mrb[0].mxu0
  %v1973 = vadd.f32 0.0, %v1972
  %v1974 = vpop.f32.mrb[0].mxu0
  %v1975 = vadd.f32 0.0, %v1974
  %1976 = vmatprep.mubr.f32.mxu0 %v1809
  %1977 = vmatmul.mubr.f32.gmra.mrb[0].mxu0 %v1808
  %v1978 = vpop.f32.mrb[0].mxu0
  %v1979 = vadd.f32 0.0, %v1978
  %v1980 = vpop.f32.mrb[0].mxu0
  %v1981 = vadd.f32 0.0, %v1980
  %1982 = vmatprep.mubr.f32.mxu0 %v1814
  %1983 = vmatmul.mubr.f32.gmra.mrb[0].mxu0 %v1813
  %v1984 = vpop.f32.mrb[0].mxu0
  %v1985 = vadd.f32 0.0, %v1984
  %v1986 = vpop.f32.mrb[0].mxu0
  %v1987 = vadd.f32 0.0, %v1986
  %1988 = vmatprep.mubr.f32.mxu0 %v1819
  %1989 = vmatmul.mubr.f32.gmra.mrb[0].mxu0 %v1818
  %v1990 = vpop.f32.mrb[0].mxu0
  %v1991 = vadd.f32 0.0, %v1990
  %v1992 = vpop.f32.mrb[0].mxu0
  %v1993 = vadd.f32 0.0, %v1992
  %1994 = vmatprep.mubr.f32.mxu0 %v1824
  %1995 = vmatmul.mubr.f32.gmra.mrb[0].mxu0 %v1823
  %v1996 = vpop.f32.mrb[0].mxu0
  %v1997 = vadd.f32 0.0, %v1996
  %v1998 = vpop.f32.mrb[0].mxu0
  %v1999 = vadd.f32 0.0, %v1998
  %2000 = vmatprep.mubr.f32.mxu0 %v1829
  %2001 = vmatmul.mubr.f32.gmra.mrb[0].mxu0 %v1828
  %v2002 = vpop.f32.mrb[0].mxu0
  %v2003 = vadd.f32 0.0, %v2002
  %v2004 = vpop.f32.mrb[0].mxu0
  %v2005 = vadd.f32 0.0, %v2004
  %2006 = vmatprep.mubr.f32.mxu0 %v1834
  %2007 = vmatmul.mubr.f32.gmra.mrb[0].mxu0 %v1833
  %v2008 = vpop.f32.mrb[0].mxu0
  %v2009 = vadd.f32 0.0, %v2008
  %v2010 = vpop.f32.mrb[0].mxu0
  %v2011 = vadd.f32 0.0, %v2010
  %2012 = vmatprep.mubr.f32.mxu0 %v1839
  %2013 = vmatmul.mubr.f32.gmra.mrb[0].mxu0 %v1838
  %v2014 = vpop.f32.mrb[0].mxu0
  %v2015 = vadd.f32 0.0, %v2014
  %v2016 = vpop.f32.mrb[0].mxu0
  %v2017 = vadd.f32 0.0, %v2016
  %2018 = vmatprep.mubr.f32.mxu0 %v1844
  %2019 = vmatmul.mubr.f32.gmra.mrb[0].mxu0 %v1843
  %v2020 = vpop.f32.mrb[0].mxu0
  %v2021 = vadd.f32 0.0, %v2020
  %v2022 = vpop.f32.mrb[0].mxu0
  %v2023 = vadd.f32 0.0, %v2022
  %2024 = vmatprep.mubr.f32.mxu0 %v1849
  %2025 = vmatmul.mubr.f32.gmra.mrb[0].mxu0 %v1848
  %v2026 = vpop.f32.mrb[0].mxu0
  %v2027 = vadd.f32 0.0, %v2026
  %v2028 = vpop.f32.mrb[0].mxu0
  %v2029 = vadd.f32 0.0, %v2028
  %2030 = vmatprep.mubr.f32.mxu0 %v1854
  %2031 = vmatmul.mubr.f32.gmra.mrb[0].mxu0 %v1853
  %v2032 = vpop.f32.mrb[0].mxu0
  %v2033 = vadd.f32 0.0, %v2032
  %v2034 = vpop.f32.mrb[0].mxu0
  %v2035 = vadd.f32 0.0, %v2034
  %2036 = vmatprep.mubr.f32.mxu0 %v1859
  %2037 = vmatmul.mubr.f32.gmra.mrb[0].mxu0 %v1858
  %v2038 = vpop.f32.mrb[0].mxu0
  %v2039 = vadd.f32 0.0, %v2038
  %v2040 = vpop.f32.mrb[0].mxu0
  %v2041 = vadd.f32 0.0, %v2040
  %2042 = vmatprep.mubr.f32.mxu0 %v1864
  %2043 = vmatmul.mubr.f32.gmra.mrb[0].mxu0 %v1863
  %v2044 = vpop.f32.mrb[0].mxu0
  %v2045 = vadd.f32 0.0, %v2044
  %v2046 = vpop.f32.mrb[0].mxu0
  %v2047 = vadd.f32 0.0, %v2046
  %2048 = vmatprep.mubr.f32.mxu0 %v1869
  %2049 = vmatmul.mubr.f32.gmra.mrb[0].mxu0 %v1868
  %v2050 = vpop.f32.mrb[0].mxu0
  %v2051 = vadd.f32 0.0, %v2050
  %v2052 = vpop.f32.mrb[0].mxu0
  %v2053 = vadd.f32 0.0, %v2052
  %2054 = vmatprep.mubr.f32.mxu0 %v1874
  %2055 = vmatmul.mubr.f32.gmra.mrb[0].mxu0 %v1873
  %v2056 = vpop.f32.mrb[0].mxu0
  %v2057 = vadd.f32 0.0, %v2056
  %v2058 = vpop.f32.mrb[0].mxu0
  %v2059 = vadd.f32 0.0, %v2058
  %2060 = vmatprep.mubr.f32.mxu0 %v1879
  %2061 = vmatmul.mubr.f32.gmra.mrb[0].mxu0 %v1878
  %v2062 = vpop.f32.mrb[0].mxu0
  %v2063 = vadd.f32 0.0, %v2062
  %v2064 = vpop.f32.mrb[0].mxu0
  %v2065 = vadd.f32 0.0, %v2064
  %2066 = vmatprep.mubr.f32.mxu0 %v1884
  %2067 = vmatmul.mubr.f32.gmra.mrb[0].mxu0 %v1883
  %v2068 = vpop.f32.mrb[0].mxu0
  %v2069 = vadd.f32 0.0, %v2068
  %v2070 = vpop.f32.mrb[0].mxu0
  %v2071 = vadd.f32 0.0, %v2070
  %2072 = vdwg.mxu0
  %2073 = vmatprep.subr.mxu0 %v1693
  %2074 = vmatpush1.msra.mxu0 %v1692
  %2075 = vmatprep.subr.mxu0 %v1695
  %2076 = vmatpush1.msra.mxu0 %v1694
  %2077 = vmatprep.subr.mxu0 %v1697
  %2078 = vmatpush1.msra.mxu0 %v1696
  %2079 = vmatprep.subr.mxu0 %v1699
  %2080 = vmatpush1.msra.mxu0 %v1698
  %2081 = vmatprep.subr.mxu0 %v1701
  %2082 = vmatpush1.msra.mxu0 %v1700
  %2083 = vmatprep.subr.mxu0 %v1703
  %2084 = vmatpush1.msra.mxu0 %v1702
  %2085 = vmatprep.subr.mxu0 %v1705
  %2086 = vmatpush1.msra.mxu0 %v1704
  %2087 = vmatprep.subr.mxu0 %v1707
  %2088 = vmatpush1.msra.mxu0 %v1706
  %2089 = vmatprep.subr.mxu0 %v1709
  %2090 = vmatpush1.msra.mxu0 %v1708
  %2091 = vmatprep.subr.mxu0 %v1711
  %2092 = vmatpush1.msra.mxu0 %v1710
  %2093 = vmatprep.subr.mxu0 %v1713
  %2094 = vmatpush1.msra.mxu0 %v1712
  %2095 = vmatprep.subr.mxu0 %v1715
  %2096 = vmatpush1.msra.mxu0 %v1714
  %2097 = vmatprep.subr.mxu0 %v1717
  %2098 = vmatpush1.msra.mxu0 %v1716
  %2099 = vmatprep.subr.mxu0 %v1719
  %2100 = vmatpush1.msra.mxu0 %v1718
  %2101 = vmatprep.subr.mxu0 %v1721
  %2102 = vmatpush1.msra.mxu0 %v1720
  %2103 = vmatprep.subr.mxu0 %v1723
  %2104 = vmatpush1.msra.mxu0 %v1722
  %2105 = vmatprep.subr.mxu0 %v1725
  %2106 = vmatpush1.msra.mxu0 %v1724
  %2107 = vmatprep.subr.mxu0 %v1727
  %2108 = vmatpush1.msra.mxu0 %v1726
  %2109 = vmatprep.subr.mxu0 %v1729
  %2110 = vmatpush1.msra.mxu0 %v1728
  %2111 = vmatprep.subr.mxu0 %v1731
  %2112 = vmatpush1.msra.mxu0 %v1730
  %2113 = vmatprep.subr.mxu0 %v1733
  %2114 = vmatpush1.msra.mxu0 %v1732
  %2115 = vmatprep.subr.mxu0 %v1735
  %2116 = vmatpush1.msra.mxu0 %v1734
  %2117 = vmatprep.subr.mxu0 %v1737
  %2118 = vmatpush1.msra.mxu0 %v1736
  %2119 = vmatprep.subr.mxu0 %v1739
  %2120 = vmatpush1.msra.mxu0 %v1738
  %2121 = vmatprep.subr.mxu0 %v1741
  %2122 = vmatpush1.msra.mxu0 %v1740
  %2123 = vmatprep.subr.mxu0 %v1743
  %2124 = vmatpush1.msra.mxu0 %v1742
  %2125 = vmatprep.subr.mxu0 %v1745
  %2126 = vmatpush1.msra.mxu0 %v1744
  %2127 = vmatprep.subr.mxu0 %v1747
  %2128 = vmatpush1.msra.mxu0 %v1746
  %2129 = vmatprep.subr.mxu0 %v1749
  %2130 = vmatpush1.msra.mxu0 %v1748
  %2131 = vmatprep.subr.mxu0 %v1751
  %2132 = vmatpush1.msra.mxu0 %v1750
  %2133 = vmatprep.subr.mxu0 %v1753
  %2134 = vmatpush1.msra.mxu0 %v1752
  %2135 = vmatprep.subr.mxu0 %v1755
  %2136 = vmatpush1.msra.mxu0 %v1754
  %2137 = vmatprep.mubr.f32.mxu0 %v1791
  %2138 = vmatmul.mubr.f32.gmra.mrb[0].mxu0 %v1790
  %v2139 = vpop.f32.mrb[0].mxu0
  %v2140 = vadd.f32 %v1955, %v2139
  %v2141 = vpop.f32.mrb[0].mxu0
  %v2142 = vadd.f32 %v1957, %v2141
  %2143 = vmatprep.mubr.f32.mxu0 %v1796
  %2144 = vmatmul.mubr.f32.gmra.mrb[0].mxu0 %v1795
  %v2145 = vpop.f32.mrb[0].mxu0
  %v2146 = vadd.f32 %v1961, %v2145
  %v2147 = vpop.f32.mrb[0].mxu0
  %v2148 = vadd.f32 %v1963, %v2147
  %2149 = vmatprep.mubr.f32.mxu0 %v1801
  %2150 = vmatmul.mubr.f32.gmra.mrb[0].mxu0 %v1800
  %v2151 = vpop.f32.mrb[0].mxu0
  %v2152 = vadd.f32 %v1967, %v2151
  %v2153 = vpop.f32.mrb[0].mxu0
  %v2154 = vadd.f32 %v1969, %v2153
  %2155 = vmatprep.mubr.f32.mxu0 %v1806
  %2156 = vmatmul.mubr.f32.gmra.mrb[0].mxu0 %v1805
  %v2157 = vpop.f32.mrb[0].mxu0
  %v2158 = vadd.f32 %v1973, %v2157
  %v2159 = vpop.f32.mrb[0].mxu0
  %v2160 = vadd.f32 %v1975, %v2159
  %2161 = vmatprep.mubr.f32.mxu0 %v1811
  %2162 = vmatmul.mubr.f32.gmra.mrb[0].mxu0 %v1810
  %v2163 = vpop.f32.mrb[0].mxu0
  %v2164 = vadd.f32 %v1979, %v2163
  %v2165 = vpop.f32.mrb[0].mxu0
  %v2166 = vadd.f32 %v1981, %v2165
  %2167 = vmatprep.mubr.f32.mxu0 %v1816
  %2168 = vmatmul.mubr.f32.gmra.mrb[0].mxu0 %v1815
  %v2169 = vpop.f32.mrb[0].mxu0
  %v2170 = vadd.f32 %v1985, %v2169
  %v2171 = vpop.f32.mrb[0].mxu0
  %v2172 = vadd.f32 %v1987, %v2171
  %2173 = vmatprep.mubr.f32.mxu0 %v1821
  %2174 = vmatmul.mubr.f32.gmra.mrb[0].mxu0 %v1820
  %v2175 = vpop.f32.mrb[0].mxu0
  %v2176 = vadd.f32 %v1991, %v2175
  %v2177 = vpop.f32.mrb[0].mxu0
  %v2178 = vadd.f32 %v1993, %v2177
  %2179 = vmatprep.mubr.f32.mxu0 %v1826
  %2180 = vmatmul.mubr.f32.gmra.mrb[0].mxu0 %v1825
  %v2181 = vpop.f32.mrb[0].mxu0
  %v2182 = vadd.f32 %v1997, %v2181
  %v2183 = vpop.f32.mrb[0].mxu0
  %v2184 = vadd.f32 %v1999, %v2183
  %2185 = vmatprep.mubr.f32.mxu0 %v1831
  %2186 = vmatmul.mubr.f32.gmra.mrb[0].mxu0 %v1830
  %v2187 = vpop.f32.mrb[0].mxu0
  %v2188 = vadd.f32 %v2003, %v2187
  %v2189 = vpop.f32.mrb[0].mxu0
  %v2190 = vadd.f32 %v2005, %v2189
  %2191 = vmatprep.mubr.f32.mxu0 %v1836
  %2192 = vmatmul.mubr.f32.gmra.mrb[0].mxu0 %v1835
  %v2193 = vpop.f32.mrb[0].mxu0
  %v2194 = vadd.f32 %v2009, %v2193
  %v2195 = vpop.f32.mrb[0].mxu0
  %v2196 = vadd.f32 %v2011, %v2195
  %2197 = vmatprep.mubr.f32.mxu0 %v1841
  %2198 = vmatmul.mubr.f32.gmra.mrb[0].mxu0 %v1840
  %v2199 = vpop.f32.mrb[0].mxu0
  %v2200 = vadd.f32 %v2015, %v2199
  %v2201 = vpop.f32.mrb[0].mxu0
  %v2202 = vadd.f32 %v2017, %v2201
  %2203 = vmatprep.mubr.f32.mxu0 %v1846
  %2204 = vmatmul.mubr.f32.gmra.mrb[0].mxu0 %v1845
  %v2205 = vpop.f32.mrb[0].mxu0
  %v2206 = vadd.f32 %v2021, %v2205
  %v2207 = vpop.f32.mrb[0].mxu0
  %v2208 = vadd.f32 %v2023, %v2207
  %2209 = vmatprep.mubr.f32.mxu0 %v1851
  %2210 = vmatmul.mubr.f32.gmra.mrb[0].mxu0 %v1850
  %v2211 = vpop.f32.mrb[0].mxu0
  %v2212 = vadd.f32 %v2027, %v2211
  %v2213 = vpop.f32.mrb[0].mxu0
  %v2214 = vadd.f32 %v2029, %v2213
  %2215 = vmatprep.mubr.f32.mxu0 %v1856
  %2216 = vmatmul.mubr.f32.gmra.mrb[0].mxu0 %v1855
  %v2217 = vpop.f32.mrb[0].mxu0
  %v2218 = vadd.f32 %v2033, %v2217
  %v2219 = vpop.f32.mrb[0].mxu0
  %v2220 = vadd.f32 %v2035, %v2219
  %2221 = vmatprep.mubr.f32.mxu0 %v1861
  %2222 = vmatmul.mubr.f32.gmra.mrb[0].mxu0 %v1860
  %v2223 = vpop.f32.mrb[0].mxu0
  %v2224 = vadd.f32 %v2039, %v2223
  %v2225 = vpop.f32.mrb[0].mxu0
  %v2226 = vadd.f32 %v2041, %v2225
  %2227 = vmatprep.mubr.f32.mxu0 %v1866
  %2228 = vmatmul.mubr.f32.gmra.mrb[0].mxu0 %v1865
  %v2229 = vpop.f32.mrb[0].mxu0
  %v2230 = vadd.f32 %v2045, %v2229
  %v2231 = vpop.f32.mrb[0].mxu0
  %v2232 = vadd.f32 %v2047, %v2231
  %2233 = vmatprep.mubr.f32.mxu0 %v1871
  %2234 = vmatmul.mubr.f32.gmra.mrb[0].mxu0 %v1870
  %v2235 = vpop.f32.mrb[0].mxu0
  %v2236 = vadd.f32 %v2051, %v2235
  %v2237 = vpop.f32.mrb[0].mxu0
  %v2238 = vadd.f32 %v2053, %v2237
  %2239 = vmatprep.mubr.f32.mxu0 %v1876
  %2240 = vmatmul.mubr.f32.gmra.mrb[0].mxu0 %v1875
  %v2241 = vpop.f32.mrb[0].mxu0
  %v2242 = vadd.f32 %v2057, %v2241
  %v2243 = vpop.f32.mrb[0].mxu0
  %v2244 = vadd.f32 %v2059, %v2243
  %2245 = vmatprep.mubr.f32.mxu0 %v1881
  %2246 = vmatmul.mubr.f32.gmra.mrb[0].mxu0 %v1880
  %v2247 = vpop.f32.mrb[0].mxu0
  %v2248 = vadd.f32 %v2063, %v2247
  %v2249 = vpop.f32.mrb[0].mxu0
  %v2250 = vadd.f32 %v2065, %v2249
  %2251 = vmatprep.mubr.f32.mxu0 %v1886
  %2252 = vmatmul.mubr.f32.gmra.mrb[0].mxu0 %v1885
  %v2253 = vpop.f32.mrb[0].mxu0
  %v2254 = vadd.f32 %v2069, %v2253
  %v2255 = vpop.f32.mrb[0].mxu0
  %v2256 = vadd.f32 %v2071, %v2255
  %2257 = vdwg.mxu0
  %2258 = vmatprep.subr.mxu0 %v1757
  %2259 = vmatpush1.msra.mxu0 %v1756
  %2260 = vmatprep.subr.mxu0 %v1759
  %2261 = vmatpush1.msra.mxu0 %v1758
  %2262 = vmatprep.subr.mxu0 %v1761
  %2263 = vmatpush1.msra.mxu0 %v1760
  %2264 = vmatprep.subr.mxu0 %v1763
  %2265 = vmatpush1.msra.mxu0 %v1762
  %2266 = vmatprep.subr.mxu0 %v1765
  %2267 = vmatpush1.msra.mxu0 %v1764
  %2268 = vmatprep.subr.mxu0 %v1767
  %2269 = vmatpush1.msra.mxu0 %v1766
  %2270 = vmatprep.subr.mxu0 %v1769
  %2271 = vmatpush1.msra.mxu0 %v1768
  %2272 = vmatprep.subr.mxu0 %v1771
  %2273 = vmatpush1.msra.mxu0 %v1770
  %2274 = vmatprep.subr.mxu0 %v1773
  %2275 = vmatpush1.msra.mxu0 %v1772
  %2276 = vmatprep.subr.mxu0 %v1775
  %2277 = vmatpush1.msra.mxu0 %v1774
  %2278 = vmatprep.subr.mxu0 %v1777
  %2279 = vmatpush1.msra.mxu0 %v1776
  %2280 = vmatprep.subr.mxu0 %v1779
  %2281 = vmatpush1.msra.mxu0 %v1778
  %2282 = vmatprep.subr.mxu0 %v1781
  %2283 = vmatpush1.msra.mxu0 %v1780
  %2284 = vmatprep.subr.mxu0 %v1783
  %2285 = vmatpush1.msra.mxu0 %v1782
  %2286 = vmatprep.subr.mxu0 %v1785
  %2287 = vmatpush1.msra.mxu0 %v1784
  %2288 = vmatprep.subr.mxu0 %v1787
  %2289 = vmatpush1.msra.mxu0 %v1786
  %2290 = vmatprep.subr.mxu0 0.0
  %2291 = vmatpush1.msra.mxu0 0.0
  %2292 = vmatprep.subr.mxu0 0.0
  %2293 = vmatpush1.msra.mxu0 0.0
  %2294 = vmatprep.subr.mxu0 0.0
  %2295 = vmatpush1.msra.mxu0 0.0
  %2296 = vmatprep.subr.mxu0 0.0
  %2297 = vmatpush1.msra.mxu0 0.0
  %2298 = vmatprep.subr.mxu0 0.0
  %2299 = vmatpush1.msra.mxu0 0.0
  %2300 = vmatprep.subr.mxu0 0.0
  %2301 = vmatpush1.msra.mxu0 0.0
  %2302 = vmatprep.subr.mxu0 0.0
  %2303 = vmatpush1.msra.mxu0 0.0
  %2304 = vmatprep.subr.mxu0 0.0
  %2305 = vmatpush1.msra.mxu0 0.0
  %2306 = vmatprep.subr.mxu0 0.0
  %2307 = vmatpush1.msra.mxu0 0.0
  %2308 = vmatprep.subr.mxu0 0.0
  %2309 = vmatpush1.msra.mxu0 0.0
  %2310 = vmatprep.subr.mxu0 0.0
  %2311 = vmatpush1.msra.mxu0 0.0
  %2312 = vmatprep.subr.mxu0 0.0
  %2313 = vmatpush1.msra.mxu0 0.0
  %2314 = vmatprep.subr.mxu0 0.0
  %2315 = vmatpush1.msra.mxu0 0.0
  %2316 = vmatprep.subr.mxu0 0.0
  %2317 = vmatpush1.msra.mxu0 0.0
  %2318 = vmatprep.subr.mxu0 0.0
  %2319 = vmatpush1.msra.mxu0 0.0
  %2320 = vmatprep.subr.mxu0 0.0
  %2321 = vmatpush1.msra.mxu0 0.0
  %2322 = vmatprep.mubr.f32.mxu0 0.0
  %2323 = vmatmul.mubr.f32.gmra.mrb[0].mxu0 %v1792
  %v2324 = vpop.f32.mrb[0].mxu0
  %v2325 = vadd.f32 %v2140, %v2324
  %v2326 = vpop.f32.mrb[0].mxu0
  %v2327 = vadd.f32 %v2142, %v2326
  %2328 = vmatprep.mubr.f32.mxu0 0.0
  %2329 = vmatmul.mubr.f32.gmra.mrb[0].mxu0 %v1797
  %v2330 = vpop.f32.mrb[0].mxu0
  %v2331 = vadd.f32 %v2146, %v2330
  %v2332 = vpop.f32.mrb[0].mxu0
  %v2333 = vadd.f32 %v2148, %v2332
  %2334 = vmatprep.mubr.f32.mxu0 0.0
  %2335 = vmatmul.mubr.f32.gmra.mrb[0].mxu0 %v1802
  %v2336 = vpop.f32.mrb[0].mxu0
  %v2337 = vadd.f32 %v2152, %v2336
  %v2338 = vpop.f32.mrb[0].mxu0
  %v2339 = vadd.f32 %v2154, %v2338
  %2340 = vmatprep.mubr.f32.mxu0 0.0
  %2341 = vmatmul.mubr.f32.gmra.mrb[0].mxu0 %v1807
  %v2342 = vpop.f32.mrb[0].mxu0
  %v2343 = vadd.f32 %v2158, %v2342
  %v2344 = vpop.f32.mrb[0].mxu0
  %v2345 = vadd.f32 %v2160, %v2344
  %2346 = vmatprep.mubr.f32.mxu0 0.0
  %2347 = vmatmul.mubr.f32.gmra.mrb[0].mxu0 %v1812
  %v2348 = vpop.f32.mrb[0].mxu0
  %v2349 = vadd.f32 %v2164, %v2348
  %v2350 = vpop.f32.mrb[0].mxu0
  %v2351 = vadd.f32 %v2166, %v2350
  %2352 = vmatprep.mubr.f32.mxu0 0.0
  %2353 = vmatmul.mubr.f32.gmra.mrb[0].mxu0 %v1817
  %v2354 = vpop.f32.mrb[0].mxu0
  %v2355 = vadd.f32 %v2170, %v2354
  %v2356 = vpop.f32.mrb[0].mxu0
  %v2357 = vadd.f32 %v2172, %v2356
  %2358 = vmatprep.mubr.f32.mxu0 0.0
  %2359 = vmatmul.mubr.f32.gmra.mrb[0].mxu0 %v1822
  %v2360 = vpop.f32.mrb[0].mxu0
  %v2361 = vadd.f32 %v2176, %v2360
  %v2362 = vpop.f32.mrb[0].mxu0
  %v2363 = vadd.f32 %v2178, %v2362
  %2364 = vmatprep.mubr.f32.mxu0 0.0
  %2365 = vmatmul.mubr.f32.gmra.mrb[0].mxu0 %v1827
  %v2366 = vpop.f32.mrb[0].mxu0
  %v2367 = vadd.f32 %v2182, %v2366
  %v2368 = vpop.f32.mrb[0].mxu0
  %v2369 = vadd.f32 %v2184, %v2368
  %2370 = vmatprep.mubr.f32.mxu0 0.0
  %2371 = vmatmul.mubr.f32.gmra.mrb[0].mxu0 %v1832
  %v2372 = vpop.f32.mrb[0].mxu0
  %v2373 = vadd.f32 %v2188, %v2372
  %v2374 = vpop.f32.mrb[0].mxu0
  %v2375 = vadd.f32 %v2190, %v2374
  %2376 = vmatprep.mubr.f32.mxu0 0.0
  %2377 = vmatmul.mubr.f32.gmra.mrb[0].mxu0 %v1837
  %v2378 = vpop.f32.mrb[0].mxu0
  %v2379 = vadd.f32 %v2194, %v2378
  %v2380 = vpop.f32.mrb[0].mxu0
  %v2381 = vadd.f32 %v2196, %v2380
  %2382 = vmatprep.mubr.f32.mxu0 0.0
  %2383 = vmatmul.mubr.f32.gmra.mrb[0].mxu0 %v1842
  %v2384 = vpop.f32.mrb[0].mxu0
  %v2385 = vadd.f32 %v2200, %v2384
  %v2386 = vpop.f32.mrb[0].mxu0
  %v2387 = vadd.f32 %v2202, %v2386
  %2388 = vmatprep.mubr.f32.mxu0 0.0
  %2389 = vmatmul.mubr.f32.gmra.mrb[0].mxu0 %v1847
  %v2390 = vpop.f32.mrb[0].mxu0
  %v2391 = vadd.f32 %v2206, %v2390
  %v2392 = vpop.f32.mrb[0].mxu0
  %v2393 = vadd.f32 %v2208, %v2392
  %2394 = vmatprep.mubr.f32.mxu0 0.0
  %2395 = vmatmul.mubr.f32.gmra.mrb[0].mxu0 %v1852
  %v2396 = vpop.f32.mrb[0].mxu0
  %v2397 = vadd.f32 %v2212, %v2396
  %v2398 = vpop.f32.mrb[0].mxu0
  %v2399 = vadd.f32 %v2214, %v2398
  %2400 = vmatprep.mubr.f32.mxu0 0.0
  %2401 = vmatmul.mubr.f32.gmra.mrb[0].mxu0 %v1857
  %v2402 = vpop.f32.mrb[0].mxu0
  %v2403 = vadd.f32 %v2218, %v2402
  %v2404 = vpop.f32.mrb[0].mxu0
  %v2405 = vadd.f32 %v2220, %v2404
  %2406 = vmatprep.mubr.f32.mxu0 0.0
  %2407 = vmatmul.mubr.f32.gmra.mrb[0].mxu0 %v1862
  %v2408 = vpop.f32.mrb[0].mxu0
  %v2409 = vadd.f32 %v2224, %v2408
  %v2410 = vpop.f32.mrb[0].mxu0
  %v2411 = vadd.f32 %v2226, %v2410
  %2412 = vmatprep.mubr.f32.mxu0 0.0
  %2413 = vmatmul.mubr.f32.gmra.mrb[0].mxu0 %v1867
  %v2414 = vpop.f32.mrb[0].mxu0
  %v2415 = vadd.f32 %v2230, %v2414
  %v2416 = vpop.f32.mrb[0].mxu0
  %v2417 = vadd.f32 %v2232, %v2416
  %2418 = vmatprep.mubr.f32.mxu0 0.0
  %2419 = vmatmul.mubr.f32.gmra.mrb[0].mxu0 %v1872
  %v2420 = vpop.f32.mrb[0].mxu0
  %v2421 = vadd.f32 %v2236, %v2420
  %v2422 = vpop.f32.mrb[0].mxu0
  %v2423 = vadd.f32 %v2238, %v2422
  %2424 = vmatprep.mubr.f32.mxu0 0.0
  %2425 = vmatmul.mubr.f32.gmra.mrb[0].mxu0 %v1877
  %v2426 = vpop.f32.mrb[0].mxu0
  %v2427 = vadd.f32 %v2242, %v2426
  %v2428 = vpop.f32.mrb[0].mxu0
  %v2429 = vadd.f32 %v2244, %v2428
  %2430 = vmatprep.mubr.f32.mxu0 0.0
  %2431 = vmatmul.mubr.f32.gmra.mrb[0].mxu0 %v1882
  %v2432 = vpop.f32.mrb[0].mxu0
  %v2433 = vadd.f32 %v2248, %v2432
  %v2434 = vpop.f32.mrb[0].mxu0
  %v2435 = vadd.f32 %v2250, %v2434
  %2436 = vmatprep.mubr.f32.mxu0 0.0
  %2437 = vmatmul.mubr.f32.gmra.mrb[0].mxu0 %v1887
  %v2438 = vpop.f32.mrb[0].mxu0
  %v2439 = vadd.f32 %v2254, %v2438
  %v2440 = vpop.f32.mrb[0].mxu0
  %v2441 = vadd.f32 %v2256, %v2440
  %2442 = vdwg.mxu0
  %2443 = vst [vmem:[%s5] sm:$0xff] %v2325
  %vm2444 = vcmask 556032
  %2445 = vst.msk [vmem:[%s5 + $0x8] sm:$0xff] %vm2444, %v2327
  %2446 = vst [vmem:[%s5 + $0x10] sm:$0xff] %v2331
  %2447 = vst.msk [vmem:[%s5 + $0x18] sm:$0xff] %vm2444, %v2333
  %2448 = vst [vmem:[%s5 + $0x20] sm:$0xff] %v2337
  %2449 = vst.msk [vmem:[%s5 + $0x28] sm:$0xff] %vm2444, %v2339
  %2450 = vst [vmem:[%s5 + $0x30] sm:$0xff] %v2343
  %2451 = vst.msk [vmem:[%s5 + $0x38] sm:$0xff] %vm2444, %v2345
  %2452 = vst [vmem:[%s5 + $0x40] sm:$0xff] %v2349
  %2453 = vst.msk [vmem:[%s5 + $0x48] sm:$0xff] %vm2444, %v2351
  %2454 = vst [vmem:[%s5 + $0x50] sm:$0xff] %v2355
  %2455 = vst.msk [vmem:[%s5 + $0x58] sm:$0xff] %vm2444, %v2357
  %2456 = vst [vmem:[%s5 + $0x60] sm:$0xff] %v2361
  %2457 = vst.msk [vmem:[%s5 + $0x68] sm:$0xff] %vm2444, %v2363
  %2458 = vst [vmem:[%s5 + $0x70] sm:$0xff] %v2367
  %2459 = vst.msk [vmem:[%s5 + $0x78] sm:$0xff] %vm2444, %v2369
  %2460 = vst [vmem:[%s5 + $0x80] sm:$0xff] %v2373
  %2461 = vst.msk [vmem:[%s5 + $0x88] sm:$0xff] %vm2444, %v2375
  %2462 = vst [vmem:[%s5 + $0x90] sm:$0xff] %v2379
  %2463 = vst.msk [vmem:[%s5 + $0x98] sm:$0xff] %vm2444, %v2381
  %2464 = vst [vmem:[%s5 + $0xa0] sm:$0xff] %v2385
  %2465 = vst.msk [vmem:[%s5 + $0xa8] sm:$0xff] %vm2444, %v2387
  %2466 = vst [vmem:[%s5 + $0xb0] sm:$0xff] %v2391
  %2467 = vst.msk [vmem:[%s5 + $0xb8] sm:$0xff] %vm2444, %v2393
  %2468 = vst [vmem:[%s5 + $0xc0] sm:$0xff] %v2397
  %2469 = vst.msk [vmem:[%s5 + $0xc8] sm:$0xff] %vm2444, %v2399
  %2470 = vst [vmem:[%s5 + $0xd0] sm:$0xff] %v2403
  %2471 = vst.msk [vmem:[%s5 + $0xd8] sm:$0xff] %vm2444, %v2405
  %2472 = vst [vmem:[%s5 + $0xe0] sm:$0xff] %v2409
  %2473 = vst.msk [vmem:[%s5 + $0xe8] sm:$0xff] %vm2444, %v2411
  %2474 = vst [vmem:[%s5 + $0xf0] sm:$0xff] %v2415
  %2475 = vst.msk [vmem:[%s5 + $0xf8] sm:$0xff] %vm2444, %v2417
  %2476 = vst [vmem:[%s5 + $0x100] sm:$0xff] %v2421
  %2477 = vst.msk [vmem:[%s5 + $0x108] sm:$0xff] %vm2444, %v2423
  %2478 = vst [vmem:[%s5 + $0x110] sm:$0xff] %v2427
  %2479 = vst.msk [vmem:[%s5 + $0x118] sm:$0xff] %vm2444, %v2429
  %2480 = vst [vmem:[%s5 + $0x120] sm:$0xff] %v2433
  %2481 = vst.msk [vmem:[%s5 + $0x128] sm:$0xff] %vm2444, %v2435
  %2482 = vst [vmem:[%s5 + $0x130] sm:$0xff] %v2439
  %2483 = vst.msk [vmem:[%s5 + $0x138] sm:$0xff] %vm2444, %v2441
  // Predicated region
  $region22: #{se_block_forward.1} parent=0 // pred_check
    _
  $region23: #{se_block_forward.1} parent=0 // pred_check_branch
    %2485 = sbr.rel (0) target = $region25
  $region24: #{se_block_forward.1} parent=0 // pred_region
    _
  $region25: #{se_block_forward.1} parent=0 // pred_fallthru
    _
  // Predicated region
  $region26: #{se_block_forward.1} parent=0 // pred_check
    _
  $region27: #{se_block_forward.1} parent=0 // pred_check_branch
    %2487 = sbr.rel (0) target = $region29
  $region28: #{se_block_forward.1} parent=0 // pred_region
    _
  $region29: #{se_block_forward.1} parent=0 // pred_fallthru
    _

</llo_original>
